<compile_context>
chip_gen: v5e
topology: v5e:2x2
jax: 0.10.0
libtpu: 0.0.40
codegen_flags: <defaults>
</compile_context>

<pallas_src>
import jax
import jax.numpy as jnp
from jax.experimental import pallas as pl
from jax.experimental.pallas import tpu as pltpu

EPS = 1e-5
MM_DTYPE = jnp.bfloat16   # matmul input dtype (accumulation is always f32)


# ----------------------------------------------------------------------------
# Fused TSB kernel: conv1 -> conv2 -> conv3 -> FTB on one (Bt*H, W*C) tile.
# ----------------------------------------------------------------------------
def _tsb_kernel(x_ref, s_ref, w1_ref, w2_ref, w3_ref, wfc_ref, watt_ref,
                wx_ref, b_ref, out_ref):
    """Lane-dense activations: rows = Bt*H (batch folded into M), cols = W*C.

    x_ref:    (M, WC)      input tile, f32  (M = Bt*H)
    s_ref:    (KH*M, M)    0/1 freq shift-and-pad matrix (batch block-diag)
    w1_ref:   (KH*WC, WC)  per-freq-tap banded conv1 weight (BN folded)
    w2_ref:   (WC, WC)     banded conv2 (1 x mid_k) weight (BN folded)
    w3_ref:   (KH*WC, WC)  per-freq-tap banded conv3 weight (BN folded)
    wfc_ref:  (M, M)       block-diag(freq_fc) over the Bt batch rows
    watt_ref: (WC, WC)     FTB 1x1 conv weight, attention path (BN folded)
    wx_ref:   (WC, WC)     FTB 1x1 conv weight, input path (BN folded)
    b_ref:    (4, WC)      folded biases tiled over W (rows: c1, c2, c3, ftb)
    out_ref:  (M, WC)      output tile, f32
    """
    M, WC = x_ref.shape
    mm = w1_ref.dtype

    def conv_bn_relu(a, w_ref_, bias_row):
        kh = w_ref_.shape[0] // WC
        a_mm = a.astype(mm)
        if kh == 1:
            acc = jnp.dot(a_mm, w_ref_[...], preferred_element_type=jnp.float32)
        else:
            # All KH freq-shifted (zero-padded, batch-blocked) copies of the
            # activation from ONE aligned matmul; rows [d*M:(d+1)*M] of xs are
            # the activation shifted by (d - KH//2) along freq.  Then KH
            # accumulated (M, WC) x (WC, WC) matmuls — no scratch, no
            # misaligned sublane slices.
            xs = jnp.dot(s_ref[...], a_mm,
                         preferred_element_type=jnp.float32).astype(mm)
            acc = jnp.dot(xs[0:M], w_ref_[0:WC],
                          preferred_element_type=jnp.float32)
            for d in range(1, kh):
                acc = acc + jnp.dot(xs[d * M:(d + 1) * M],
                                    w_ref_[d * WC:(d + 1) * WC],
                                    preferred_element_type=jnp.float32)
        return jnp.maximum(acc + bias_row, 0.0)

    a1 = conv_bn_relu(x_ref[...], w1_ref, b_ref[0:1, :])
    a2 = conv_bn_relu(a1, w2_ref, b_ref[1:2, :])
    a3 = conv_bn_relu(a2, w3_ref, b_ref[2:3, :])

    # FTB: block-diag freq FC, then (concat -> 1x1 conv -> BN -> ReLU) as two
    # accumulated matmuls (no (M, 2*WC) concat materialization).
    a3_mm = a3.astype(mm)
    att = jnp.dot(wfc_ref[...], a3_mm, preferred_element_type=jnp.float32)
    y = jnp.dot(att.astype(mm), watt_ref[...],
                preferred_element_type=jnp.float32)
    y = y + jnp.dot(a3_mm, wx_ref[...], preferred_element_type=jnp.float32)
    out_ref[...] = jnp.maximum(y + b_ref[3:4, :], 0.0)


# ----------------------------------------------------------------------------
# Wrapper (lane-dense (B, H, W*C) layout in and out)
# ----------------------------------------------------------------------------
def choose_batch_tile(batch, freq, max_rows=256):
    """Largest divisor of `batch` whose tile row count Bt*freq <= max_rows."""
    bt = 1
    for cand in range(1, batch + 1):
        if batch % cand == 0 and cand * freq <= max(max_rows, freq):
            bt = cand
    return bt


def _const_spec(shape, multi_step):
    index_map = lambda i: (0,) * len(shape)
    if multi_step:
        # Grid-invariant operand: one buffer is enough (no double-buffer DMA).
        return pl.BlockSpec(shape, index_map, pipeline_mode=pl.Buffered(1))
    return pl.BlockSpec(shape, index_map)


@jax.jit
def tsb_forward(x, ops):
    """x: (B, H, W*C) lane-dense f32 -> (B, H, W*C) f32."""
    B, H, WC = x.shape
    M = ops["wfc_bd"].shape[0]            # rows per grid step = Bt * H
    assert M % H == 0 and (B * H) % M == 0, "batch tile must divide batch"
    nt = (B * H) // M                     # grid steps (1 at the test size)
    multi = nt > 1

    x2d = x.reshape(B * H, WC)            # free reshape, stays lane-dense
    out = pl.pallas_call(
        _tsb_kernel,
        out_shape=jax.ShapeDtypeStruct((B * H, WC), jnp.float32),
        grid=(nt,),
        in_specs=[
            pl.BlockSpec((M, WC), lambda i: (i, 0)),
            _const_spec(ops["shift"].shape, multi),
            _const_spec(ops["w1"].shape, multi),
            _const_spec(ops["w2"].shape, multi),
            _const_spec(ops["w3"].shape, multi),
            _const_spec(ops["wfc_bd"].shape, multi),
            _const_spec(ops["watt"].shape, multi),
            _const_spec(ops["wx"].shape, multi),
            _const_spec(ops["bias"].shape, multi),
        ],
        out_specs=pl.BlockSpec((M, WC), lambda i: (i, 0)),
        compiler_params=pltpu.CompilerParams(
            # Each step is now a fat (Bt*H)-row tile, so a megacore split
            # across steps (when nt > 1) carries real work per core.
            dimension_semantics=("parallel",)),
    )(x2d, ops["shift"], ops["w1"], ops["w2"], ops["w3"], ops["wfc_bd"],
      ops["watt"], ops["wx"], ops["bias"])
    return out.reshape(B, H, WC)


# ----------------------------------------------------------------------------
# Parameter construction (deterministic, synthetic) with BN folding
# ----------------------------------------------------------------------------
def make_conv_bn_params(key, cin, cout, kh, kw):
    k = jax.random.split(key, 6)
    w = 0.1 * jax.random.normal(k[0], (cout, cin, kh, kw), jnp.float32)   # OIHW
    b = 0.1 * jax.random.normal(k[1], (cout,), jnp.float32)
    gamma = 1.0 + 0.1 * jax.random.normal(k[2], (cout,), jnp.float32)
    beta = 0.1 * jax.random.normal(k[3], (cout,), jnp.float32)
    mean = 0.1 * jax.random.normal(k[4], (cout,), jnp.float32)
    var = jax.random.uniform(k[5], (cout,), jnp.float32, 0.5, 1.5)
    scale = gamma / jnp.sqrt(var + EPS)
    w_fold = w * scale[:, None, None, None]
    b_fold = (b - mean) * scale + beta
    w_hwio = jnp.transpose(w_fold, (2, 3, 1, 0))      # (KH, KW, Cin, Cout)
    return w_hwio, b_fold


def make_tsb_params(key, input_dim, in_channel, kernel_size, middle_kernel_size):
    ks = jax.random.split(key, 5)
    p = {}
    p["c1_hwio"], p["c1_b"] = make_conv_bn_params(
        ks[0], in_channel, in_channel, kernel_size, kernel_size)
    p["c2_hwio"], p["c2_b"] = make_conv_bn_params(
        ks[1], in_channel, in_channel, 1, middle_kernel_size)
    p["c3_hwio"], p["c3_b"] = make_conv_bn_params(
        ks[2], in_channel, in_channel, kernel_size, kernel_size)
    # FTB: freq_fc (no bias) + 1x1 conv(2C -> C) + BN
    p["wfc"] = 0.1 * jax.random.normal(
        ks[3], (input_dim, input_dim), jnp.float32)
    w1_hwio, b1 = make_conv_bn_params(ks[4], 2 * in_channel, in_channel, 1, 1)
    w1_2d = w1_hwio.reshape(2 * in_channel, in_channel)   # rows = [att | input]
    p["ftb_watt"] = w1_2d[:in_channel]
    p["ftb_wx"] = w1_2d[in_channel:]
    p["ftb_b"] = b1
    return p


# ----------------------------------------------------------------------------
# Operand preparation (banded weights, shift matrix, block-diag freq_fc)
# ----------------------------------------------------------------------------
def _banded_tap_weights(w_hwio, W):
    """(KH, KW, Cin, Cout) conv taps -> (KH, W*Cin, W*Cout): for each freq tap
    a block-banded matrix acting on one lane-dense row (time taps + Cin->Cout
    mixing + 'SAME' zero padding along time baked into the band)."""
    KH, KW, Cin, Cout = w_hwio.shape
    pad = KW // 2
    w_in = jnp.arange(W)[None, :, None]
    w_out = jnp.arange(W)[None, None, :]
    kw = jnp.arange(KW)[:, None, None]
    ind = (w_in == w_out + kw - pad).astype(jnp.float32)    # (KW, W, W)
    m = jnp.einsum("kab,hkio->haibo", ind, w_hwio)           # (KH,W,Cin,W,Cout)
    return m.reshape(KH, W * Cin, W * Cout)


def _freq_shift_matrix(kh, H, batch_tile):
    """0/1 matrix S of shape (KH*M, M), M = batch_tile*H:
    (S @ a)[d*M + m] = activation row of the same batch element shifted by
    (d - KH//2) along freq, or 0 where the 'SAME' zero padding applies."""
    pad = kh // 2
    M = batch_tile * H
    rows = jnp.arange(M)
    b = rows // H
    h = rows % H
    d = jnp.arange(kh)[:, None, None]
    same_batch = b[None, :, None] == b[None, None, :]
    hit = h[None, None, :] == (h[None, :, None] + d - pad)
    s = (same_batch & hit).astype(jnp.float32)               # (KH, M, M)
    return s.reshape(kh * M, M)


def _block_diag(w, batch_tile):
    eye = jnp.eye(batch_tile, dtype=w.dtype)
    n = w.shape[0]
    return jnp.einsum("ab,ph->apbh", eye, w).reshape(batch_tile * n,
                                                     batch_tile * n)


def prepare_tsb_operands(p, W, H, batch_tile, mm_dtype=MM_DTYPE):
    C = p["c1_b"].shape[0]
    WC = W * C
    kh1 = p["c1_hwio"].shape[0]
    kh3 = p["c3_hwio"].shape[0]
    assert kh1 == kh3, "conv1/conv3 share the freq kernel size in TSB"
    w1 = _banded_tap_weights(p["c1_hwio"], W).reshape(kh1 * WC, WC)
    w2 = _banded_tap_weights(p["c2_hwio"], W).reshape(WC, WC)
    w3 = _banded_tap_weights(p["c3_hwio"], W).reshape(kh3 * WC, WC)
    watt = _banded_tap_weights(
        p["ftb_watt"].reshape(1, 1, C, C), W).reshape(WC, WC)
    wx = _banded_tap_weights(
        p["ftb_wx"].reshape(1, 1, C, C), W).reshape(WC, WC)
    return {
        "shift": _freq_shift_matrix(kh1, H, batch_tile).astype(mm_dtype),
        "w1": w1.astype(mm_dtype),
        "w2": w2.astype(mm_dtype),
        "w3": w3.astype(mm_dtype),
        "wfc_bd": _block_diag(p["wfc"], batch_tile).astype(mm_dtype),
        "watt": watt.astype(mm_dtype),
        "wx": wx.astype(mm_dtype),
        "bias": jnp.stack([jnp.tile(p["c1_b"], W), jnp.tile(p["c2_b"], W),
                           jnp.tile(p["c3_b"], W), jnp.tile(p["ftb_b"], W)]),
    }


# ----------------------------------------------------------------------------
# Pure-JAX reference (mm_dtype = matmul input dtype, f32 accumulation)
# ----------------------------------------------------------------------------
def tsb_reference(amp_nchw, p, mm_dtype):
    c = lambda a: a.astype(mm_dtype)
    x = jnp.transpose(amp_nchw, (0, 2, 3, 1))   # NHWC

    def conv(x, w_hwio, b):
        y = jax.lax.conv_general_dilated(
            c(x), c(w_hwio), (1, 1), "SAME",
            dimension_numbers=("NHWC", "HWIO", "NHWC"),
            preferred_element_type=jnp.float32)
        return jnp.maximum(y + b, 0.0)

    x = conv(x, p["c1_hwio"], p["c1_b"])
    x = conv(x, p["c2_hwio"], p["c2_b"])
    x = conv(x, p["c3_hwio"], p["c3_b"])
    att = jnp.einsum("ph,bhwc->bpwc", c(p["wfc"]), c(x),
                     preferred_element_type=jnp.float32)
    y = (jnp.einsum("bhwc,cd->bhwd", c(att), c(p["ftb_watt"]),
                    preferred_element_type=jnp.float32)
         + jnp.einsum("bhwc,cd->bhwd", c(x), c(p["ftb_wx"]),
                      preferred_element_type=jnp.float32)
         + p["ftb_b"])
    return jnp.transpose(jnp.maximum(y, 0.0), (0, 3, 1, 2))


# ----------------------------------------------------------------------------
if __name__ == "__main__":
    B = 2
    in_channel = 8
    input_dim = 16          # freq axis (H), must equal freq_fc dim
    time_frames = 16        # time axis (W); W * C = 128 -> fully lane-dense
    kernel_size = 5
    middle_kernel_size = 9  # module default 25 > W at this small test size

    key = jax.random.PRNGKey(0)
    kx, kp = jax.random.split(key)
    amp = jax.random.normal(
        kx, (B, in_channel, input_dim, time_frames), jnp.float32)
    params = make_tsb_params(
        kp, input_dim, in_channel, kernel_size, middle_kernel_size)

    bt = choose_batch_tile(B, input_dim)              # = 2 -> grid of 1 step
    ops = prepare_tsb_operands(params, time_frames, input_dim, bt, MM_DTYPE)

    # The surrounding UNet is assumed to keep activations lane-dense, so the
    # NCHW <-> (B, H, W*C) shuffles below are test-harness-only conversions.
    x_ld = jnp.transpose(amp, (0, 2, 3, 1)).reshape(
        B, input_dim, time_frames * in_channel)
    out_ld = jax.block_until_ready(tsb_forward(x_ld, ops))
    out = jnp.transpose(
        out_ld.reshape(B, input_dim, time_frames, in_channel), (0, 3, 1, 2))
    assert out.shape == (B, in_channel, input_dim, time_frames)

    # (1) Kernel-math check vs. a reference using the same matmul precision.
    ref_mm = jax.block_until_ready(tsb_reference(amp, params, MM_DTYPE))
    assert jnp.allclose(out, ref_mm, rtol=2e-2, atol=2e-2), (
        f"matched-precision max abs err {jnp.max(jnp.abs(out - ref_mm))}")
    # (2) Semantics check vs. the full-f32 reference (bf16 matmul tolerance).
    ref_f32 = jax.block_until_ready(tsb_reference(amp, params, jnp.float32))
    assert jnp.allclose(out, ref_f32, rtol=1e-1, atol=1e-1), (
        f"f32-reference max abs err {jnp.max(jnp.abs(out - ref_f32))}")

    print("KERNEL_OK")
</pallas_src>

<mosaic_0001>
module attributes {stable_mosaic.version = 11 : i64} {
  func.func @_tsb_kernel(%arg0: i32, %arg1: memref<32x128xf32, #tpu.memory_space<vmem>>, %arg2: memref<160x32xbf16, #tpu.memory_space<vmem>>, %arg3: memref<640x128xbf16, #tpu.memory_space<vmem>>, %arg4: memref<128x128xbf16, #tpu.memory_space<vmem>>, %arg5: memref<640x128xbf16, #tpu.memory_space<vmem>>, %arg6: memref<32x32xbf16, #tpu.memory_space<vmem>>, %arg7: memref<128x128xbf16, #tpu.memory_space<vmem>>, %arg8: memref<128x128xbf16, #tpu.memory_space<vmem>>, %arg9: memref<4x128xf32, #tpu.memory_space<vmem>>, %arg10: memref<32x128xf32, #tpu.memory_space<vmem>>) attributes {dimension_semantics = [#tpu.dimension_semantics<parallel>], iteration_bounds = array<i64: 1>, scalar_prefetch = 0 : i64, scratch_operands = 0 : i64, tpu.core_type = #tpu.core_type<tc>, window_params = [{transform_indices = @transform_0, window_bounds = array<i64: 32, 128>}, {pipeline_mode = #tpu.pipeline_mode<synchronous>, transform_indices = @transform_1, window_bounds = array<i64: 160, 32>}, {pipeline_mode = #tpu.pipeline_mode<synchronous>, transform_indices = @transform_2, window_bounds = array<i64: 640, 128>}, {pipeline_mode = #tpu.pipeline_mode<synchronous>, transform_indices = @transform_3, window_bounds = array<i64: 128, 128>}, {pipeline_mode = #tpu.pipeline_mode<synchronous>, transform_indices = @transform_4, window_bounds = array<i64: 640, 128>}, {pipeline_mode = #tpu.pipeline_mode<synchronous>, transform_indices = @transform_5, window_bounds = array<i64: 32, 32>}, {pipeline_mode = #tpu.pipeline_mode<synchronous>, transform_indices = @transform_6, window_bounds = array<i64: 128, 128>}, {pipeline_mode = #tpu.pipeline_mode<synchronous>, transform_indices = @transform_7, window_bounds = array<i64: 128, 128>}, {pipeline_mode = #tpu.pipeline_mode<synchronous>, transform_indices = @transform_8, window_bounds = array<i64: 4, 128>}, {transform_indices = @transform_9, window_bounds = array<i64: 32, 128>}]} {
    %c0 = arith.constant 0 : index
    %c0_0 = arith.constant 0 : index
    %0 = vector.load %arg1[%c0, %c0_0] : memref<32x128xf32, #tpu.memory_space<vmem>>, vector<32x128xf32>
    %c0_1 = arith.constant 0 : index
    %c0_2 = arith.constant 0 : index
    %1 = vector.load %arg9[%c0_1, %c0_2] : memref<4x128xf32, #tpu.memory_space<vmem>>, vector<1x128xf32>
    %2 = arith.truncf %0 : vector<32x128xf32> to vector<32x128xbf16>
    %c0_3 = arith.constant 0 : index
    %c0_4 = arith.constant 0 : index
    %3 = vector.load %arg2[%c0_3, %c0_4] : memref<160x32xbf16, #tpu.memory_space<vmem>>, vector<160x32xbf16>
    %cst = arith.constant dense<0.000000e+00> : vector<160x128xf32>
    %4 = tpu.matmul %3, %2, %cst {dimension_numbers = #tpu.dot_dimension_numbers<[1], [0], [0], [1], [0, 0, 1, 1], [], []>} : vector<160x32xbf16>, vector<32x128xbf16>, vector<160x128xf32> -> vector<160x128xf32>
    %5 = arith.truncf %4 : vector<160x128xf32> to vector<160x128xbf16>
    %6 = vector.extract_strided_slice %5 {offsets = [0, 0], sizes = [32, 128], strides = [1, 1]} : vector<160x128xbf16> to vector<32x128xbf16>
    %c0_5 = arith.constant 0 : index
    %c0_6 = arith.constant 0 : index
    %7 = vector.load %arg3[%c0_5, %c0_6] : memref<640x128xbf16, #tpu.memory_space<vmem>>, vector<128x128xbf16>
    %cst_7 = arith.constant dense<0.000000e+00> : vector<32x128xf32>
    %8 = tpu.matmul %6, %7, %cst_7 {dimension_numbers = #tpu.dot_dimension_numbers<[1], [0], [0], [1], [0, 0, 1, 1], [], []>} : vector<32x128xbf16>, vector<128x128xbf16>, vector<32x128xf32> -> vector<32x128xf32>
    %9 = vector.extract_strided_slice %5 {offsets = [32, 0], sizes = [32, 128], strides = [1, 1]} : vector<160x128xbf16> to vector<32x128xbf16>
    %c128 = arith.constant 128 : index
    %c0_8 = arith.constant 0 : index
    %10 = vector.load %arg3[%c128, %c0_8] : memref<640x128xbf16, #tpu.memory_space<vmem>>, vector<128x128xbf16>
    %cst_9 = arith.constant dense<0.000000e+00> : vector<32x128xf32>
    %11 = tpu.matmul %9, %10, %cst_9 {dimension_numbers = #tpu.dot_dimension_numbers<[1], [0], [0], [1], [0, 0, 1, 1], [], []>} : vector<32x128xbf16>, vector<128x128xbf16>, vector<32x128xf32> -> vector<32x128xf32>
    %12 = arith.addf %8, %11 : vector<32x128xf32>
    %13 = vector.extract_strided_slice %5 {offsets = [64, 0], sizes = [32, 128], strides = [1, 1]} : vector<160x128xbf16> to vector<32x128xbf16>
    %c256 = arith.constant 256 : index
    %c0_10 = arith.constant 0 : index
    %14 = vector.load %arg3[%c256, %c0_10] : memref<640x128xbf16, #tpu.memory_space<vmem>>, vector<128x128xbf16>
    %cst_11 = arith.constant dense<0.000000e+00> : vector<32x128xf32>
    %15 = tpu.matmul %13, %14, %cst_11 {dimension_numbers = #tpu.dot_dimension_numbers<[1], [0], [0], [1], [0, 0, 1, 1], [], []>} : vector<32x128xbf16>, vector<128x128xbf16>, vector<32x128xf32> -> vector<32x128xf32>
    %16 = arith.addf %12, %15 : vector<32x128xf32>
    %17 = vector.extract_strided_slice %5 {offsets = [96, 0], sizes = [32, 128], strides = [1, 1]} : vector<160x128xbf16> to vector<32x128xbf16>
    %c384 = arith.constant 384 : index
    %c0_12 = arith.constant 0 : index
    %18 = vector.load %arg3[%c384, %c0_12] : memref<640x128xbf16, #tpu.memory_space<vmem>>, vector<128x128xbf16>
    %cst_13 = arith.constant dense<0.000000e+00> : vector<32x128xf32>
    %19 = tpu.matmul %17, %18, %cst_13 {dimension_numbers = #tpu.dot_dimension_numbers<[1], [0], [0], [1], [0, 0, 1, 1], [], []>} : vector<32x128xbf16>, vector<128x128xbf16>, vector<32x128xf32> -> vector<32x128xf32>
    %20 = arith.addf %16, %19 : vector<32x128xf32>
    %21 = vector.extract_strided_slice %5 {offsets = [128, 0], sizes = [32, 128], strides = [1, 1]} : vector<160x128xbf16> to vector<32x128xbf16>
    %c512 = arith.constant 512 : index
    %c0_14 = arith.constant 0 : index
    %22 = vector.load %arg3[%c512, %c0_14] : memref<640x128xbf16, #tpu.memory_space<vmem>>, vector<128x128xbf16>
    %cst_15 = arith.constant dense<0.000000e+00> : vector<32x128xf32>
    %23 = tpu.matmul %21, %22, %cst_15 {dimension_numbers = #tpu.dot_dimension_numbers<[1], [0], [0], [1], [0, 0, 1, 1], [], []>} : vector<32x128xbf16>, vector<128x128xbf16>, vector<32x128xf32> -> vector<32x128xf32>
    %24 = arith.addf %20, %23 : vector<32x128xf32>
    %25 = vector.broadcast %1 : vector<1x128xf32> to vector<32x128xf32>
    %26 = arith.addf %24, %25 : vector<32x128xf32>
    %cst_16 = arith.constant 0.000000e+00 : f32
    %27 = vector.broadcast %cst_16 : f32 to vector<32x128xf32>
    %28 = arith.maximumf %26, %27 : vector<32x128xf32>
    %c1 = arith.constant 1 : index
    %c0_17 = arith.constant 0 : index
    %29 = vector.load %arg9[%c1, %c0_17] : memref<4x128xf32, #tpu.memory_space<vmem>>, vector<1x128xf32>
    %30 = arith.truncf %28 : vector<32x128xf32> to vector<32x128xbf16>
    %c0_18 = arith.constant 0 : index
    %c0_19 = arith.constant 0 : index
    %31 = vector.load %arg4[%c0_18, %c0_19] : memref<128x128xbf16, #tpu.memory_space<vmem>>, vector<128x128xbf16>
    %cst_20 = arith.constant dense<0.000000e+00> : vector<32x128xf32>
    %32 = tpu.matmul %30, %31, %cst_20 {dimension_numbers = #tpu.dot_dimension_numbers<[1], [0], [0], [1], [0, 0, 1, 1], [], []>} : vector<32x128xbf16>, vector<128x128xbf16>, vector<32x128xf32> -> vector<32x128xf32>
    %33 = vector.broadcast %29 : vector<1x128xf32> to vector<32x128xf32>
    %34 = arith.addf %32, %33 : vector<32x128xf32>
    %cst_21 = arith.constant 0.000000e+00 : f32
    %35 = vector.broadcast %cst_21 : f32 to vector<32x128xf32>
    %36 = arith.maximumf %34, %35 : vector<32x128xf32>
    %c2 = arith.constant 2 : index
    %c0_22 = arith.constant 0 : index
    %37 = vector.load %arg9[%c2, %c0_22] : memref<4x128xf32, #tpu.memory_space<vmem>>, vector<1x128xf32>
    %38 = arith.truncf %36 : vector<32x128xf32> to vector<32x128xbf16>
    %c0_23 = arith.constant 0 : index
    %c0_24 = arith.constant 0 : index
    %39 = vector.load %arg2[%c0_23, %c0_24] : memref<160x32xbf16, #tpu.memory_space<vmem>>, vector<160x32xbf16>
    %cst_25 = arith.constant dense<0.000000e+00> : vector<160x128xf32>
    %40 = tpu.matmul %39, %38, %cst_25 {dimension_numbers = #tpu.dot_dimension_numbers<[1], [0], [0], [1], [0, 0, 1, 1], [], []>} : vector<160x32xbf16>, vector<32x128xbf16>, vector<160x128xf32> -> vector<160x128xf32>
    %41 = arith.truncf %40 : vector<160x128xf32> to vector<160x128xbf16>
    %42 = vector.extract_strided_slice %41 {offsets = [0, 0], sizes = [32, 128], strides = [1, 1]} : vector<160x128xbf16> to vector<32x128xbf16>
    %c0_26 = arith.constant 0 : index
    %c0_27 = arith.constant 0 : index
    %43 = vector.load %arg5[%c0_26, %c0_27] : memref<640x128xbf16, #tpu.memory_space<vmem>>, vector<128x128xbf16>
    %cst_28 = arith.constant dense<0.000000e+00> : vector<32x128xf32>
    %44 = tpu.matmul %42, %43, %cst_28 {dimension_numbers = #tpu.dot_dimension_numbers<[1], [0], [0], [1], [0, 0, 1, 1], [], []>} : vector<32x128xbf16>, vector<128x128xbf16>, vector<32x128xf32> -> vector<32x128xf32>
    %45 = vector.extract_strided_slice %41 {offsets = [32, 0], sizes = [32, 128], strides = [1, 1]} : vector<160x128xbf16> to vector<32x128xbf16>
    %c128_29 = arith.constant 128 : index
    %c0_30 = arith.constant 0 : index
    %46 = vector.load %arg5[%c128_29, %c0_30] : memref<640x128xbf16, #tpu.memory_space<vmem>>, vector<128x128xbf16>
    %cst_31 = arith.constant dense<0.000000e+00> : vector<32x128xf32>
    %47 = tpu.matmul %45, %46, %cst_31 {dimension_numbers = #tpu.dot_dimension_numbers<[1], [0], [0], [1], [0, 0, 1, 1], [], []>} : vector<32x128xbf16>, vector<128x128xbf16>, vector<32x128xf32> -> vector<32x128xf32>
    %48 = arith.addf %44, %47 : vector<32x128xf32>
    %49 = vector.extract_strided_slice %41 {offsets = [64, 0], sizes = [32, 128], strides = [1, 1]} : vector<160x128xbf16> to vector<32x128xbf16>
    %c256_32 = arith.constant 256 : index
    %c0_33 = arith.constant 0 : index
    %50 = vector.load %arg5[%c256_32, %c0_33] : memref<640x128xbf16, #tpu.memory_space<vmem>>, vector<128x128xbf16>
    %cst_34 = arith.constant dense<0.000000e+00> : vector<32x128xf32>
    %51 = tpu.matmul %49, %50, %cst_34 {dimension_numbers = #tpu.dot_dimension_numbers<[1], [0], [0], [1], [0, 0, 1, 1], [], []>} : vector<32x128xbf16>, vector<128x128xbf16>, vector<32x128xf32> -> vector<32x128xf32>
    %52 = arith.addf %48, %51 : vector<32x128xf32>
    %53 = vector.extract_strided_slice %41 {offsets = [96, 0], sizes = [32, 128], strides = [1, 1]} : vector<160x128xbf16> to vector<32x128xbf16>
    %c384_35 = arith.constant 384 : index
    %c0_36 = arith.constant 0 : index
    %54 = vector.load %arg5[%c384_35, %c0_36] : memref<640x128xbf16, #tpu.memory_space<vmem>>, vector<128x128xbf16>
    %cst_37 = arith.constant dense<0.000000e+00> : vector<32x128xf32>
    %55 = tpu.matmul %53, %54, %cst_37 {dimension_numbers = #tpu.dot_dimension_numbers<[1], [0], [0], [1], [0, 0, 1, 1], [], []>} : vector<32x128xbf16>, vector<128x128xbf16>, vector<32x128xf32> -> vector<32x128xf32>
    %56 = arith.addf %52, %55 : vector<32x128xf32>
    %57 = vector.extract_strided_slice %41 {offsets = [128, 0], sizes = [32, 128], strides = [1, 1]} : vector<160x128xbf16> to vector<32x128xbf16>
    %c512_38 = arith.constant 512 : index
    %c0_39 = arith.constant 0 : index
    %58 = vector.load %arg5[%c512_38, %c0_39] : memref<640x128xbf16, #tpu.memory_space<vmem>>, vector<128x128xbf16>
    %cst_40 = arith.constant dense<0.000000e+00> : vector<32x128xf32>
    %59 = tpu.matmul %57, %58, %cst_40 {dimension_numbers = #tpu.dot_dimension_numbers<[1], [0], [0], [1], [0, 0, 1, 1], [], []>} : vector<32x128xbf16>, vector<128x128xbf16>, vector<32x128xf32> -> vector<32x128xf32>
    %60 = arith.addf %56, %59 : vector<32x128xf32>
    %61 = vector.broadcast %37 : vector<1x128xf32> to vector<32x128xf32>
    %62 = arith.addf %60, %61 : vector<32x128xf32>
    %cst_41 = arith.constant 0.000000e+00 : f32
    %63 = vector.broadcast %cst_41 : f32 to vector<32x128xf32>
    %64 = arith.maximumf %62, %63 : vector<32x128xf32>
    %65 = arith.truncf %64 : vector<32x128xf32> to vector<32x128xbf16>
    %c0_42 = arith.constant 0 : index
    %c0_43 = arith.constant 0 : index
    %66 = vector.load %arg6[%c0_42, %c0_43] : memref<32x32xbf16, #tpu.memory_space<vmem>>, vector<32x32xbf16>
    %cst_44 = arith.constant dense<0.000000e+00> : vector<32x128xf32>
    %67 = tpu.matmul %66, %65, %cst_44 {dimension_numbers = #tpu.dot_dimension_numbers<[1], [0], [0], [1], [0, 0, 1, 1], [], []>} : vector<32x32xbf16>, vector<32x128xbf16>, vector<32x128xf32> -> vector<32x128xf32>
    %68 = arith.truncf %67 : vector<32x128xf32> to vector<32x128xbf16>
    %c0_45 = arith.constant 0 : index
    %c0_46 = arith.constant 0 : index
    %69 = vector.load %arg7[%c0_45, %c0_46] : memref<128x128xbf16, #tpu.memory_space<vmem>>, vector<128x128xbf16>
    %cst_47 = arith.constant dense<0.000000e+00> : vector<32x128xf32>
    %70 = tpu.matmul %68, %69, %cst_47 {dimension_numbers = #tpu.dot_dimension_numbers<[1], [0], [0], [1], [0, 0, 1, 1], [], []>} : vector<32x128xbf16>, vector<128x128xbf16>, vector<32x128xf32> -> vector<32x128xf32>
    %c0_48 = arith.constant 0 : index
    %c0_49 = arith.constant 0 : index
    %71 = vector.load %arg8[%c0_48, %c0_49] : memref<128x128xbf16, #tpu.memory_space<vmem>>, vector<128x128xbf16>
    %cst_50 = arith.constant dense<0.000000e+00> : vector<32x128xf32>
    %72 = tpu.matmul %65, %71, %cst_50 {dimension_numbers = #tpu.dot_dimension_numbers<[1], [0], [0], [1], [0, 0, 1, 1], [], []>} : vector<32x128xbf16>, vector<128x128xbf16>, vector<32x128xf32> -> vector<32x128xf32>
    %73 = arith.addf %70, %72 : vector<32x128xf32>
    %c3 = arith.constant 3 : index
    %c0_51 = arith.constant 0 : index
    %74 = vector.load %arg9[%c3, %c0_51] : memref<4x128xf32, #tpu.memory_space<vmem>>, vector<1x128xf32>
    %75 = vector.broadcast %74 : vector<1x128xf32> to vector<32x128xf32>
    %76 = arith.addf %73, %75 : vector<32x128xf32>
    %cst_52 = arith.constant 0.000000e+00 : f32
    %77 = vector.broadcast %cst_52 : f32 to vector<32x128xf32>
    %78 = arith.maximumf %76, %77 : vector<32x128xf32>
    %c0_53 = arith.constant 0 : index
    %c0_54 = arith.constant 0 : index
    %79 = vector.load %arg10[%c0_53, %c0_54] : memref<32x128xf32, #tpu.memory_space<vmem>>, vector<32x128xf32>
    tpu.vector_store %arg10[%c0_53, %c0_54], %78 {strides = array<i32>} : memref<32x128xf32, #tpu.memory_space<vmem>>, vector<32x128xf32>,
    return
  }
  func.func @transform_0(%arg0: i32) -> (i32, i32) {
    %c0_i32 = arith.constant 0 : i32
    %c0_i32_0 = arith.constant 0 : i32
    return %arg0, %c0_i32 : i32, i32
  }
  func.func @transform_1(%arg0: i32) -> (i32, i32) {
    %c0_i32 = arith.constant 0 : i32
    %c0_i32_0 = arith.constant 0 : i32
    %c0_i32_1 = arith.constant 0 : i32
    return %c0_i32, %c0_i32_0 : i32, i32
  }
  func.func @transform_2(%arg0: i32) -> (i32, i32) {
    %c0_i32 = arith.constant 0 : i32
    %c0_i32_0 = arith.constant 0 : i32
    %c0_i32_1 = arith.constant 0 : i32
    return %c0_i32, %c0_i32_0 : i32, i32
  }
  func.func @transform_3(%arg0: i32) -> (i32, i32) {
    %c0_i32 = arith.constant 0 : i32
    %c0_i32_0 = arith.constant 0 : i32
    %c0_i32_1 = arith.constant 0 : i32
    return %c0_i32, %c0_i32_0 : i32, i32
  }
  func.func @transform_4(%arg0: i32) -> (i32, i32) {
    %c0_i32 = arith.constant 0 : i32
    %c0_i32_0 = arith.constant 0 : i32
    %c0_i32_1 = arith.constant 0 : i32
    return %c0_i32, %c0_i32_0 : i32, i32
  }
  func.func @transform_5(%arg0: i32) -> (i32, i32) {
    %c0_i32 = arith.constant 0 : i32
    %c0_i32_0 = arith.constant 0 : i32
    %c0_i32_1 = arith.constant 0 : i32
    return %c0_i32, %c0_i32_0 : i32, i32
  }
  func.func @transform_6(%arg0: i32) -> (i32, i32) {
    %c0_i32 = arith.constant 0 : i32
    %c0_i32_0 = arith.constant 0 : i32
    %c0_i32_1 = arith.constant 0 : i32
    return %c0_i32, %c0_i32_0 : i32, i32
  }
  func.func @transform_7(%arg0: i32) -> (i32, i32) {
    %c0_i32 = arith.constant 0 : i32
    %c0_i32_0 = arith.constant 0 : i32
    %c0_i32_1 = arith.constant 0 : i32
    return %c0_i32, %c0_i32_0 : i32, i32
  }
  func.func @transform_8(%arg0: i32) -> (i32, i32) {
    %c0_i32 = arith.constant 0 : i32
    %c0_i32_0 = arith.constant 0 : i32
    %c0_i32_1 = arith.constant 0 : i32
    return %c0_i32, %c0_i32_0 : i32, i32
  }
  func.func @transform_9(%arg0: i32) -> (i32, i32) {
    %c0_i32 = arith.constant 0 : i32
    %c0_i32_0 = arith.constant 0 : i32
    return %arg0, %c0_i32 : i32, i32
  }
}

</mosaic_0001>

<llo_original>
// kernel: tsb_forward.1
$region0: #{tsb_forward.1}
  #allocation0 [shape = 'u32[]', space=smem, size = 0x4, offset = 0x4, fixed_abs, tag = 'smem constant byte address 0x4 - core index']
  #allocation1 [shape = 'u32[72,128]{1,0:T(1,128)}', space=vmem, size = 0x9000, scoped, tag = 'internal scratch']
  %s0 = inlined_call_operand.vmem [shape: f32[32,128], index: 0, kind: input, shape index: {}]
  %s1 = inlined_call_operand.vmem [shape: bf16[160,32], index: 1, kind: input, shape index: {}]
  %s2 = inlined_call_operand.hbm [shape: bf16[640,128], index: 2, kind: input, shape index: {}]
  %s3 = inlined_call_operand.vmem [shape: bf16[128,128], index: 3, kind: input, shape index: {}]
  %s4 = inlined_call_operand.hbm [shape: bf16[640,128], index: 4, kind: input, shape index: {}]
  %s5 = inlined_call_operand.vmem [shape: bf16[32,32], index: 5, kind: input, shape index: {}]
  %s6 = inlined_call_operand.hbm [shape: bf16[128,128], index: 6, kind: input, shape index: {}]
  %s7 = inlined_call_operand.hbm [shape: bf16[128,128], index: 7, kind: input, shape index: {}]
  %s8 = inlined_call_operand.vmem [shape: f32[4,128], index: 8, kind: input, shape index: {}]
  %s9 = inlined_call_operand.hbm [shape: f32[32,128], index: 9, kind: output, shape index: {}]
  %s10 = sld [smem:[#allocation0]]
  $region62: #{tsb_forward.1} parent=0
    _
  %s12 = ssub.s32 1, %s10
  %s13 = scalar_select 0, %s12, %s10
  $region1: #{tsb_forward.1} parent=0
    #allocation2 [shape = 'u8[163840]{0}', space=vmem, size = 0x28000, scoped, tag = 'input window, operand 2, single buffered']
    #allocation3 [shape = 's32[1]{0}', space=sflag, size = 0x4, scoped, tag = 'scoped memory for tsb_forward.1']
    #allocation4 [shape = 's32[1]{0}', space=sflag, size = 0x4, scoped, tag = 'scoped memory for tsb_forward.1']
    #allocation5 [shape = 'u8[163840]{0}', space=vmem, size = 0x28000, scoped, tag = 'input window, operand 4, single buffered']
    #allocation6 [shape = 's32[1]{0}', space=sflag, size = 0x4, scoped, tag = 'scoped memory for tsb_forward.1']
    #allocation7 [shape = 'u8[32768]{0}', space=vmem, size = 0x8000, scoped, tag = 'input window, operand 6, single buffered']
    #allocation8 [shape = 'u8[32768]{0}', space=vmem, size = 0x8000, scoped, tag = 'input window, operand 7, single buffered']
    #allocation9 [shape = 's32[1]{0}', space=sflag, size = 0x4, scoped, tag = 'scoped memory for tsb_forward.1']
    #allocation10 [shape = 'u8[16384]{0}', space=vmem, size = 0x4000, scoped, tag = 'output window, operand 0, single buffered']
    %14 = vsyncpa [#allocation3], 0
    %15 = vsyncpa [#allocation6], 0
    %16 = vsyncpa [#allocation9], 0
    %17 = vsyncpa [#allocation4], 0
    // Predicated region
    $region2: #{tsb_forward.1} parent=1 // pred_check
      _
    $region3: #{tsb_forward.1} parent=1 // pred_check_branch
      %19 = sbr.rel (0) target = $region5
    $region4: #{tsb_forward.1} parent=1 // pred_region
      _
    $region5: #{tsb_forward.1} parent=1 // pred_fallthru
      _
    // Predicated region
    $region6: #{tsb_forward.1} parent=1 // pred_check
      _
    $region7: #{tsb_forward.1} parent=1 // pred_check_branch
      %21 = sbr.rel (0) target = $region9
    $region8: #{tsb_forward.1} parent=1 // pred_region
      _
    $region9: #{tsb_forward.1} parent=1 // pred_fallthru
      _
    // Predicated region
    $region10: #{tsb_forward.1} parent=1 // pred_check
      _
    $region11: #{tsb_forward.1} parent=1 // pred_check_branch
      %23 = sbr.rel (0) target = $region13
    $region12: #{tsb_forward.1} parent=1 // pred_region
      %25 = vsyncadd [#allocation3], 0
      %s26 = sshll.u32 %s2, 4
      %s27 = int_to_ptr.hbm [resolvable:$true] %s26
      %s28 = sshll.u32 [#allocation2], 4
      %s29 = int_to_ptr.vmem [resolvable:$true] %s28
      %34 = dma.hbm_to_vmem [thread:$0]  %s27, 5120, %s29, [#allocation3], 64, 64, 4
    $region13: #{tsb_forward.1} parent=1 // pred_fallthru
      _
    // Predicated region
    $region14: #{tsb_forward.1} parent=1 // pred_check
      _
    $region15: #{tsb_forward.1} parent=1 // pred_check_branch
      %36 = sbr.rel (0) target = $region17
    $region16: #{tsb_forward.1} parent=1 // pred_region
      _
    $region17: #{tsb_forward.1} parent=1 // pred_fallthru
      _
    // Predicated region
    $region18: #{tsb_forward.1} parent=1 // pred_check
      _
    $region19: #{tsb_forward.1} parent=1 // pred_check_branch
      %38 = sbr.rel (0) target = $region21
    $region20: #{tsb_forward.1} parent=1 // pred_region
      %40 = vsyncadd [#allocation6], 0
      %s41 = sshll.u32 %s4, 4
      %s42 = int_to_ptr.hbm [resolvable:$true] %s41
      %s43 = sshll.u32 [#allocation5], 4
      %s44 = int_to_ptr.vmem [resolvable:$true] %s43
      %49 = dma.hbm_to_vmem [thread:$0]  %s42, 5120, %s44, [#allocation6], 64, 64, 4
    $region21: #{tsb_forward.1} parent=1 // pred_fallthru
      _
    // Predicated region
    $region22: #{tsb_forward.1} parent=1 // pred_check
      _
    $region23: #{tsb_forward.1} parent=1 // pred_check_branch
      %51 = sbr.rel (0) target = $region25
    $region24: #{tsb_forward.1} parent=1 // pred_region
      _
    $region25: #{tsb_forward.1} parent=1 // pred_fallthru
      _
    // Predicated region
    $region26: #{tsb_forward.1} parent=1 // pred_check
      _
    $region27: #{tsb_forward.1} parent=1 // pred_check_branch
      %53 = sbr.rel (0) target = $region29
    $region28: #{tsb_forward.1} parent=1 // pred_region
      %55 = vsyncadd [#allocation6], 0
      %s56 = sshll.u32 %s6, 4
      %s57 = int_to_ptr.hbm [resolvable:$true] %s56
      %s58 = sshll.u32 [#allocation7], 4
      %s59 = int_to_ptr.vmem [resolvable:$true] %s58
      %64 = dma.hbm_to_vmem [thread:$0]  %s57, 1024, %s59, [#allocation6], 64, 64, 4
    $region29: #{tsb_forward.1} parent=1 // pred_fallthru
      _
    // Predicated region
    $region30: #{tsb_forward.1} parent=1 // pred_check
      _
    $region31: #{tsb_forward.1} parent=1 // pred_check_branch
      %66 = sbr.rel (0) target = $region33
    $region32: #{tsb_forward.1} parent=1 // pred_region
      %68 = vsyncadd [#allocation9], 0
      %s69 = sshll.u32 %s7, 4
      %s70 = int_to_ptr.hbm [resolvable:$true] %s69
      %s71 = sshll.u32 [#allocation8], 4
      %s72 = int_to_ptr.vmem [resolvable:$true] %s71
      %77 = dma.hbm_to_vmem [thread:$0]  %s70, 1024, %s72, [#allocation9], 64, 64, 4
    $region33: #{tsb_forward.1} parent=1 // pred_fallthru
      _
    // Predicated region
    $region34: #{tsb_forward.1} parent=1 // pred_check
      _
    $region35: #{tsb_forward.1} parent=1 // pred_check_branch
      %79 = sbr.rel (0) target = $region37
    $region36: #{tsb_forward.1} parent=1 // pred_region
      _
    $region37: #{tsb_forward.1} parent=1 // pred_fallthru
      _
    // Predicated region
    $region38: #{tsb_forward.1} parent=1 // pred_check
      _
    $region39: #{tsb_forward.1} parent=1 // pred_check_branch
      %81 = sbr.rel (0) target = $region41
    $region40: #{tsb_forward.1} parent=1 // pred_region
      %83 = dma.done [#allocation3], 5120
    $region41: #{tsb_forward.1} parent=1 // pred_fallthru
      _
    // Predicated region
    $region42: #{tsb_forward.1} parent=1 // pred_check
      _
    $region43: #{tsb_forward.1} parent=1 // pred_check_branch
      %85 = sbr.rel (0) target = $region45
    $region44: #{tsb_forward.1} parent=1 // pred_region
      %87 = dma.done [#allocation6], 5120
    $region45: #{tsb_forward.1} parent=1 // pred_fallthru
      _
    // Predicated region
    $region46: #{tsb_forward.1} parent=1 // pred_check
      _
    $region47: #{tsb_forward.1} parent=1 // pred_check_branch
      %89 = sbr.rel (0) target = $region49
    $region48: #{tsb_forward.1} parent=1 // pred_region
      %91 = dma.done [#allocation6], 1024
    $region49: #{tsb_forward.1} parent=1 // pred_fallthru
      _
    // Predicated region
    $region50: #{tsb_forward.1} parent=1 // pred_check
      _
    $region51: #{tsb_forward.1} parent=1 // pred_check_branch
      %93 = sbr.rel (0) target = $region53
    $region52: #{tsb_forward.1} parent=1 // pred_region
      %95 = dma.done [#allocation9], 1024
    $region53: #{tsb_forward.1} parent=1 // pred_fallthru
      _
    %v97 = vld [vmem:[%s0] sm:$0xff]
    %v98 = vld [vmem:[%s0 + $0x8] sm:$0xff]
    %v99 = vld [vmem:[%s0 + $0x10] sm:$0xff]
    %v100 = vld [vmem:[%s0 + $0x18] sm:$0xff]
    %v101 = vld [vmem:[%s8] sm:$0x1]
    %v102 = vpack.c.bf16 %v98, %v97
    %v103 = vpack.c.bf16 %v100, %v99
    %v104 = vld [vmem:[%s1] sm:$0xf]
    %v105 = vld [vmem:[%s1 + $0x4] sm:$0xf]
    %v106 = vld [vmem:[%s1 + $0x8] sm:$0xf]
    %v107 = vld [vmem:[%s1 + $0xc] sm:$0xf]
    %v108 = vld [vmem:[%s1 + $0x10] sm:$0xf]
    %v109 = vld [vmem:[%s1 + $0x14] sm:$0xf]
    %v110 = vld [vmem:[%s1 + $0x18] sm:$0xf]
    %v111 = vld [vmem:[%s1 + $0x1c] sm:$0xf]
    %v112 = vld [vmem:[%s1 + $0x20] sm:$0xf]
    %v113 = vld [vmem:[%s1 + $0x24] sm:$0xf]
    %v114 = vld [vmem:[%s1 + $0x28] sm:$0xf]
    %v115 = vld [vmem:[%s1 + $0x2c] sm:$0xf]
    %v116 = vld [vmem:[%s1 + $0x30] sm:$0xf]
    %v117 = vld [vmem:[%s1 + $0x34] sm:$0xf]
    %v118 = vld [vmem:[%s1 + $0x38] sm:$0xf]
    %v119 = vld [vmem:[%s1 + $0x3c] sm:$0xf]
    %v120 = vld [vmem:[%s1 + $0x40] sm:$0xf]
    %v121 = vld [vmem:[%s1 + $0x44] sm:$0xf]
    %v122 = vld [vmem:[%s1 + $0x48] sm:$0xf]
    %v123 = vld [vmem:[%s1 + $0x4c] sm:$0xf]
    %v144 = vunpack.c.l.b16 %v104
    %v145 = vunpack.c.l.b16 %v105
    %v146 = vunpack.c.l.b16 %v106
    %v147 = vunpack.c.l.b16 %v107
    %v148 = vunpack.c.l.b16 %v108
    %v149 = vunpack.c.l.b16 %v109
    %v150 = vunpack.c.l.b16 %v110
    %v151 = vunpack.c.l.b16 %v111
    %v152 = vunpack.c.l.b16 %v112
    %v153 = vunpack.c.l.b16 %v113
    %v154 = vunpack.c.l.b16 %v114
    %v155 = vunpack.c.l.b16 %v115
    %v156 = vunpack.c.l.b16 %v116
    %v157 = vunpack.c.l.b16 %v117
    %v158 = vunpack.c.l.b16 %v118
    %v159 = vunpack.c.l.b16 %v119
    %v160 = vunpack.c.l.b16 %v120
    %v161 = vunpack.c.l.b16 %v121
    %v162 = vunpack.c.l.b16 %v122
    %v163 = vunpack.c.l.b16 %v123
    %v164 = vpack.c.b16 %v145, %v144
    %v165 = vpack.c.b16 %v147, %v146
    %v166 = vpack.c.b16 %v149, %v148
    %v167 = vpack.c.b16 %v151, %v150
    %v168 = vpack.c.b16 %v153, %v152
    %v169 = vpack.c.b16 %v155, %v154
    %v170 = vpack.c.b16 %v157, %v156
    %v171 = vpack.c.b16 %v159, %v158
    %v172 = vpack.c.b16 %v161, %v160
    %v173 = vpack.c.b16 %v163, %v162
    %vm174 = vcmask 261120
    %v176 = vsel %vm174, %v164, 0
    %v179 = vsel %vm174, %v165, 0
    %v182 = vsel %vm174, %v166, 0
    %v185 = vsel %vm174, %v167, 0
    %v188 = vsel %vm174, %v168, 0
    %v191 = vsel %vm174, %v169, 0
    %v194 = vsel %vm174, %v170, 0
    %v197 = vsel %vm174, %v171, 0
    %v200 = vsel %vm174, %v172, 0
    %v203 = vsel %vm174, %v173, 0
    %205 = vmatpush.bf16.msra.mxu0 0
    %206 = vmatpush.bf16.msra.mxu0 0
    %207 = vmatpush.bf16.msra.mxu0 0
    %208 = vmatpush.bf16.msra.mxu0 0
    %209 = vmatpush.bf16.msra.mxu0 0
    %210 = vmatpush.bf16.msra.mxu0 0
    %211 = vmatpush.bf16.msra.mxu0 %v103
    %212 = vmatpush.bf16.msra.mxu0 %v102
    %213 = vmatmul.bf16.gmra.mxu0 %v176
    %v214 = vpop.f32.mrf.mxu0
    %v215 = vadd.f32 0.0, %v214
    %v216 = vpop.f32.mrf.mxu0
    %v217 = vadd.f32 0.0, %v216
    %218 = vmatmul.bf16.gmra.mxu0 %v179
    %v219 = vpop.f32.mrf.mxu0
    %v220 = vadd.f32 0.0, %v219
    %v221 = vpop.f32.mrf.mxu0
    %v222 = vadd.f32 0.0, %v221
    %223 = vmatmul.bf16.gmra.mxu0 %v182
    %v224 = vpop.f32.mrf.mxu0
    %v225 = vadd.f32 0.0, %v224
    %v226 = vpop.f32.mrf.mxu0
    %v227 = vadd.f32 0.0, %v226
    %228 = vmatmul.bf16.gmra.mxu0 %v185
    %v229 = vpop.f32.mrf.mxu0
    %v230 = vadd.f32 0.0, %v229
    %v231 = vpop.f32.mrf.mxu0
    %v232 = vadd.f32 0.0, %v231
    %233 = vmatmul.bf16.gmra.mxu0 %v188
    %v234 = vpop.f32.mrf.mxu0
    %v235 = vadd.f32 0.0, %v234
    %v236 = vpop.f32.mrf.mxu0
    %v237 = vadd.f32 0.0, %v236
    %238 = vmatmul.bf16.gmra.mxu0 %v191
    %v239 = vpop.f32.mrf.mxu0
    %v240 = vadd.f32 0.0, %v239
    %v241 = vpop.f32.mrf.mxu0
    %v242 = vadd.f32 0.0, %v241
    %243 = vmatmul.bf16.gmra.mxu0 %v194
    %v244 = vpop.f32.mrf.mxu0
    %v245 = vadd.f32 0.0, %v244
    %v246 = vpop.f32.mrf.mxu0
    %v247 = vadd.f32 0.0, %v246
    %248 = vmatmul.bf16.gmra.mxu0 %v197
    %v249 = vpop.f32.mrf.mxu0
    %v250 = vadd.f32 0.0, %v249
    %v251 = vpop.f32.mrf.mxu0
    %v252 = vadd.f32 0.0, %v251
    %253 = vmatmul.bf16.gmra.mxu0 %v200
    %v254 = vpop.f32.mrf.mxu0
    %v255 = vadd.f32 0.0, %v254
    %v256 = vpop.f32.mrf.mxu0
    %v257 = vadd.f32 0.0, %v256
    %258 = vmatmul.bf16.gmra.mxu0 %v203
    %v259 = vpop.f32.mrf.mxu0
    %v260 = vadd.f32 0.0, %v259
    %v261 = vpop.f32.mrf.mxu0
    %v262 = vadd.f32 0.0, %v261
    %263 = vdwg.mxu0
    %v264 = vpack.c.bf16 %v215, %v215
    %v265 = vpack.c.bf16 %v217, %v217
    %v266 = vpack.c.bf16 %v220, %v220
    %v267 = vpack.c.bf16 %v222, %v222
    %v268 = vpack.c.bf16 %v225, %v225
    %v269 = vpack.c.bf16 %v227, %v227
    %v270 = vpack.c.bf16 %v230, %v230
    %v271 = vpack.c.bf16 %v232, %v232
    %v272 = vpack.c.bf16 %v235, %v235
    %v273 = vpack.c.bf16 %v237, %v237
    %v274 = vpack.c.bf16 %v240, %v240
    %v275 = vpack.c.bf16 %v242, %v242
    %v276 = vpack.c.bf16 %v245, %v245
    %v277 = vpack.c.bf16 %v247, %v247
    %v278 = vpack.c.bf16 %v250, %v250
    %v279 = vpack.c.bf16 %v252, %v252
    %v280 = vpack.c.bf16 %v255, %v255
    %v281 = vpack.c.bf16 %v257, %v257
    %v282 = vpack.c.bf16 %v260, %v260
    %v283 = vpack.c.bf16 %v262, %v262
    %v284 = vld [vmem:[#allocation2] sm:$0xf]
    %v285 = vld [vmem:[#allocation2 + $0x4] sm:$0xf]
    %v286 = vld [vmem:[#allocation2 + $0x8] sm:$0xf]
    %v287 = vld [vmem:[#allocation2 + $0xc] sm:$0xf]
    %v288 = vld [vmem:[#allocation2 + $0x10] sm:$0xf]
    %v289 = vld [vmem:[#allocation2 + $0x14] sm:$0xf]
    %v290 = vld [vmem:[#allocation2 + $0x18] sm:$0xf]
    %v291 = vld [vmem:[#allocation2 + $0x1c] sm:$0xf]
    %v292 = vld [vmem:[#allocation2 + $0x20] sm:$0xf]
    %v293 = vld [vmem:[#allocation2 + $0x24] sm:$0xf]
    %v294 = vld [vmem:[#allocation2 + $0x28] sm:$0xf]
    %v295 = vld [vmem:[#allocation2 + $0x2c] sm:$0xf]
    %v296 = vld [vmem:[#allocation2 + $0x30] sm:$0xf]
    %v297 = vld [vmem:[#allocation2 + $0x34] sm:$0xf]
    %v298 = vld [vmem:[#allocation2 + $0x38] sm:$0xf]
    %v299 = vld [vmem:[#allocation2 + $0x3c] sm:$0xf]
    %v300 = vld [vmem:[#allocation2 + $0x40] sm:$0xf]
    %v301 = vld [vmem:[#allocation2 + $0x44] sm:$0xf]
    %v302 = vld [vmem:[#allocation2 + $0x48] sm:$0xf]
    %v303 = vld [vmem:[#allocation2 + $0x4c] sm:$0xf]
    %v304 = vld [vmem:[#allocation2 + $0x50] sm:$0xf]
    %v305 = vld [vmem:[#allocation2 + $0x54] sm:$0xf]
    %v306 = vld [vmem:[#allocation2 + $0x58] sm:$0xf]
    %v307 = vld [vmem:[#allocation2 + $0x5c] sm:$0xf]
    %v308 = vld [vmem:[#allocation2 + $0x60] sm:$0xf]
    %v309 = vld [vmem:[#allocation2 + $0x64] sm:$0xf]
    %v310 = vld [vmem:[#allocation2 + $0x68] sm:$0xf]
    %v311 = vld [vmem:[#allocation2 + $0x6c] sm:$0xf]
    %v312 = vld [vmem:[#allocation2 + $0x70] sm:$0xf]
    %v313 = vld [vmem:[#allocation2 + $0x74] sm:$0xf]
    %v314 = vld [vmem:[#allocation2 + $0x78] sm:$0xf]
    %v315 = vld [vmem:[#allocation2 + $0x7c] sm:$0xf]
    %v320 = vunpack.c.l.b16 %v268
    %v321 = vunpack.c.l.b16 %v269
    %v322 = vunpack.c.l.b16 %v270
    %v323 = vunpack.c.l.b16 %v271
    %v324 = vpack.c.b16 %v321, %v320
    %v325 = vpack.c.b16 %v323, %v322
    %v344 = vunpack.c.l.b16 %v300
    %v345 = vunpack.c.l.b16 %v301
    %v346 = vunpack.c.l.b16 %v302
    %v347 = vunpack.c.l.b16 %v303
    %v348 = vunpack.c.l.b16 %v304
    %v349 = vunpack.c.l.b16 %v305
    %v350 = vunpack.c.l.b16 %v306
    %v351 = vunpack.c.l.b16 %v307
    %v352 = vunpack.c.l.b16 %v308
    %v353 = vunpack.c.l.b16 %v309
    %v354 = vunpack.c.l.b16 %v310
    %v355 = vunpack.c.l.b16 %v311
    %v356 = vunpack.c.l.b16 %v312
    %v357 = vunpack.c.l.b16 %v313
    %v358 = vunpack.c.l.b16 %v314
    %v359 = vunpack.c.l.b16 %v315
    %v360 = vpack.c.b16 %v345, %v344
    %v361 = vpack.c.b16 %v347, %v346
    %v362 = vpack.c.b16 %v349, %v348
    %v363 = vpack.c.b16 %v351, %v350
    %v364 = vpack.c.b16 %v353, %v352
    %v365 = vpack.c.b16 %v355, %v354
    %v366 = vpack.c.b16 %v357, %v356
    %v367 = vpack.c.b16 %v359, %v358
    %376 = vmatpush.bf16.msra.mxu0 %v367
    %377 = vmatpush.bf16.msra.mxu0 %v366
    %378 = vmatpush.bf16.msra.mxu0 %v365
    %379 = vmatpush.bf16.msra.mxu0 %v364
    %380 = vmatpush.bf16.msra.mxu0 %v363
    %381 = vmatpush.bf16.msra.mxu0 %v362
    %382 = vmatpush.bf16.msra.mxu0 %v361
    %383 = vmatpush.bf16.msra.mxu0 %v360
    %384 = vmatmul.bf16.gmra.mxu0 %v324
    %v385 = vpop.f32.mrf.mxu0
    %v386 = vadd.f32 0.0, %v385
    %v387 = vpop.f32.mrf.mxu0
    %v388 = vadd.f32 0.0, %v387
    %389 = vmatmul.bf16.gmra.mxu0 %v325
    %v390 = vpop.f32.mrf.mxu0
    %v391 = vadd.f32 0.0, %v390
    %v392 = vpop.f32.mrf.mxu0
    %v393 = vadd.f32 0.0, %v392
    %394 = vdwg.mxu0
    %v399 = vunpack.c.l.b16 %v264
    %v400 = vunpack.c.l.b16 %v265
    %v401 = vunpack.c.l.b16 %v266
    %v402 = vunpack.c.l.b16 %v267
    %v403 = vpack.c.b16 %v400, %v399
    %v404 = vpack.c.b16 %v402, %v401
    %v423 = vunpack.c.l.b16 %v284
    %v424 = vunpack.c.l.b16 %v285
    %v425 = vunpack.c.l.b16 %v286
    %v426 = vunpack.c.l.b16 %v287
    %v427 = vunpack.c.l.b16 %v288
    %v428 = vunpack.c.l.b16 %v289
    %v429 = vunpack.c.l.b16 %v290
    %v430 = vunpack.c.l.b16 %v291
    %v431 = vunpack.c.l.b16 %v292
    %v432 = vunpack.c.l.b16 %v293
    %v433 = vunpack.c.l.b16 %v294
    %v434 = vunpack.c.l.b16 %v295
    %v435 = vunpack.c.l.b16 %v296
    %v436 = vunpack.c.l.b16 %v297
    %v437 = vunpack.c.l.b16 %v298
    %v438 = vunpack.c.l.b16 %v299
    %v439 = vpack.c.b16 %v424, %v423
    %v440 = vpack.c.b16 %v426, %v425
    %v441 = vpack.c.b16 %v428, %v427
    %v442 = vpack.c.b16 %v430, %v429
    %v443 = vpack.c.b16 %v432, %v431
    %v444 = vpack.c.b16 %v434, %v433
    %v445 = vpack.c.b16 %v436, %v435
    %v446 = vpack.c.b16 %v438, %v437
    %455 = vmatpush.bf16.msra.mxu0 %v446
    %456 = vmatpush.bf16.msra.mxu0 %v445
    %457 = vmatpush.bf16.msra.mxu0 %v444
    %458 = vmatpush.bf16.msra.mxu0 %v443
    %459 = vmatpush.bf16.msra.mxu0 %v442
    %460 = vmatpush.bf16.msra.mxu0 %v441
    %461 = vmatpush.bf16.msra.mxu0 %v440
    %462 = vmatpush.bf16.msra.mxu0 %v439
    %463 = vmatmul.bf16.gmra.mxu0 %v403
    %v464 = vpop.f32.mrf.mxu0
    %v465 = vadd.f32 %v386, %v464
    %v466 = vpop.f32.mrf.mxu0
    %v467 = vadd.f32 %v388, %v466
    %468 = vmatmul.bf16.gmra.mxu0 %v404
    %v469 = vpop.f32.mrf.mxu0
    %v470 = vadd.f32 %v391, %v469
    %v471 = vpop.f32.mrf.mxu0
    %v472 = vadd.f32 %v393, %v471
    %473 = vdwg.mxu0
    %v474 = vld [vmem:[#allocation2 + $0x80] sm:$0xf]
    %v475 = vld [vmem:[#allocation2 + $0x84] sm:$0xf]
    %v476 = vld [vmem:[#allocation2 + $0x88] sm:$0xf]
    %v477 = vld [vmem:[#allocation2 + $0x8c] sm:$0xf]
    %v478 = vld [vmem:[#allocation2 + $0x90] sm:$0xf]
    %v479 = vld [vmem:[#allocation2 + $0x94] sm:$0xf]
    %v480 = vld [vmem:[#allocation2 + $0x98] sm:$0xf]
    %v481 = vld [vmem:[#allocation2 + $0x9c] sm:$0xf]
    %v482 = vld [vmem:[#allocation2 + $0xa0] sm:$0xf]
    %v483 = vld [vmem:[#allocation2 + $0xa4] sm:$0xf]
    %v484 = vld [vmem:[#allocation2 + $0xa8] sm:$0xf]
    %v485 = vld [vmem:[#allocation2 + $0xac] sm:$0xf]
    %v486 = vld [vmem:[#allocation2 + $0xb0] sm:$0xf]
    %v487 = vld [vmem:[#allocation2 + $0xb4] sm:$0xf]
    %v488 = vld [vmem:[#allocation2 + $0xb8] sm:$0xf]
    %v489 = vld [vmem:[#allocation2 + $0xbc] sm:$0xf]
    %v494 = vunpack.c.l.b16 %v272
    %v495 = vunpack.c.l.b16 %v273
    %v496 = vunpack.c.l.b16 %v274
    %v497 = vunpack.c.l.b16 %v275
    %v498 = vpack.c.b16 %v495, %v494
    %v499 = vpack.c.b16 %v497, %v496
    %v518 = vunpack.c.l.b16 %v474
    %v519 = vunpack.c.l.b16 %v475
    %v520 = vunpack.c.l.b16 %v476
    %v521 = vunpack.c.l.b16 %v477
    %v522 = vunpack.c.l.b16 %v478
    %v523 = vunpack.c.l.b16 %v479
    %v524 = vunpack.c.l.b16 %v480
    %v525 = vunpack.c.l.b16 %v481
    %v526 = vunpack.c.l.b16 %v482
    %v527 = vunpack.c.l.b16 %v483
    %v528 = vunpack.c.l.b16 %v484
    %v529 = vunpack.c.l.b16 %v485
    %v530 = vunpack.c.l.b16 %v486
    %v531 = vunpack.c.l.b16 %v487
    %v532 = vunpack.c.l.b16 %v488
    %v533 = vunpack.c.l.b16 %v489
    %v534 = vpack.c.b16 %v519, %v518
    %v535 = vpack.c.b16 %v521, %v520
    %v536 = vpack.c.b16 %v523, %v522
    %v537 = vpack.c.b16 %v525, %v524
    %v538 = vpack.c.b16 %v527, %v526
    %v539 = vpack.c.b16 %v529, %v528
    %v540 = vpack.c.b16 %v531, %v530
    %v541 = vpack.c.b16 %v533, %v532
    %550 = vmatpush.bf16.msra.mxu0 %v541
    %551 = vmatpush.bf16.msra.mxu0 %v540
    %552 = vmatpush.bf16.msra.mxu0 %v539
    %553 = vmatpush.bf16.msra.mxu0 %v538
    %554 = vmatpush.bf16.msra.mxu0 %v537
    %555 = vmatpush.bf16.msra.mxu0 %v536
    %556 = vmatpush.bf16.msra.mxu0 %v535
    %557 = vmatpush.bf16.msra.mxu0 %v534
    %558 = vmatmul.bf16.gmra.mxu0 %v498
    %v559 = vpop.f32.mrf.mxu0
    %v560 = vadd.f32 0.0, %v559
    %v561 = vpop.f32.mrf.mxu0
    %v562 = vadd.f32 0.0, %v561
    %563 = vmatmul.bf16.gmra.mxu0 %v499
    %v564 = vpop.f32.mrf.mxu0
    %v565 = vadd.f32 0.0, %v564
    %v566 = vpop.f32.mrf.mxu0
    %v567 = vadd.f32 0.0, %v566
    %568 = vdwg.mxu0
    %v569 = vadd.f32 %v465, %v560
    %v570 = vadd.f32 %v467, %v562
    %v571 = vadd.f32 %v470, %v565
    %v572 = vadd.f32 %v472, %v567
    %v573 = vld [vmem:[#allocation2 + $0xc0] sm:$0xf]
    %v574 = vld [vmem:[#allocation2 + $0xc4] sm:$0xf]
    %v575 = vld [vmem:[#allocation2 + $0xc8] sm:$0xf]
    %v576 = vld [vmem:[#allocation2 + $0xcc] sm:$0xf]
    %v577 = vld [vmem:[#allocation2 + $0xd0] sm:$0xf]
    %v578 = vld [vmem:[#allocation2 + $0xd4] sm:$0xf]
    %v579 = vld [vmem:[#allocation2 + $0xd8] sm:$0xf]
    %v580 = vld [vmem:[#allocation2 + $0xdc] sm:$0xf]
    %v581 = vld [vmem:[#allocation2 + $0xe0] sm:$0xf]
    %v582 = vld [vmem:[#allocation2 + $0xe4] sm:$0xf]
    %v583 = vld [vmem:[#allocation2 + $0xe8] sm:$0xf]
    %v584 = vld [vmem:[#allocation2 + $0xec] sm:$0xf]
    %v585 = vld [vmem:[#allocation2 + $0xf0] sm:$0xf]
    %v586 = vld [vmem:[#allocation2 + $0xf4] sm:$0xf]
    %v587 = vld [vmem:[#allocation2 + $0xf8] sm:$0xf]
    %v588 = vld [vmem:[#allocation2 + $0xfc] sm:$0xf]
    %v593 = vunpack.c.l.b16 %v276
    %v594 = vunpack.c.l.b16 %v277
    %v595 = vunpack.c.l.b16 %v278
    %v596 = vunpack.c.l.b16 %v279
    %v597 = vpack.c.b16 %v594, %v593
    %v598 = vpack.c.b16 %v596, %v595
    %v617 = vunpack.c.l.b16 %v573
    %v618 = vunpack.c.l.b16 %v574
    %v619 = vunpack.c.l.b16 %v575
    %v620 = vunpack.c.l.b16 %v576
    %v621 = vunpack.c.l.b16 %v577
    %v622 = vunpack.c.l.b16 %v578
    %v623 = vunpack.c.l.b16 %v579
    %v624 = vunpack.c.l.b16 %v580
    %v625 = vunpack.c.l.b16 %v581
    %v626 = vunpack.c.l.b16 %v582
    %v627 = vunpack.c.l.b16 %v583
    %v628 = vunpack.c.l.b16 %v584
    %v629 = vunpack.c.l.b16 %v585
    %v630 = vunpack.c.l.b16 %v586
    %v631 = vunpack.c.l.b16 %v587
    %v632 = vunpack.c.l.b16 %v588
    %v633 = vpack.c.b16 %v618, %v617
    %v634 = vpack.c.b16 %v620, %v619
    %v635 = vpack.c.b16 %v622, %v621
    %v636 = vpack.c.b16 %v624, %v623
    %v637 = vpack.c.b16 %v626, %v625
    %v638 = vpack.c.b16 %v628, %v627
    %v639 = vpack.c.b16 %v630, %v629
    %v640 = vpack.c.b16 %v632, %v631
    %649 = vmatpush.bf16.msra.mxu0 %v640
    %650 = vmatpush.bf16.msra.mxu0 %v639
    %651 = vmatpush.bf16.msra.mxu0 %v638
    %652 = vmatpush.bf16.msra.mxu0 %v637
    %653 = vmatpush.bf16.msra.mxu0 %v636
    %654 = vmatpush.bf16.msra.mxu0 %v635
    %655 = vmatpush.bf16.msra.mxu0 %v634
    %656 = vmatpush.bf16.msra.mxu0 %v633
    %657 = vmatmul.bf16.gmra.mxu0 %v597
    %v658 = vpop.f32.mrf.mxu0
    %v659 = vadd.f32 0.0, %v658
    %v660 = vpop.f32.mrf.mxu0
    %v661 = vadd.f32 0.0, %v660
    %662 = vmatmul.bf16.gmra.mxu0 %v598
    %v663 = vpop.f32.mrf.mxu0
    %v664 = vadd.f32 0.0, %v663
    %v665 = vpop.f32.mrf.mxu0
    %v666 = vadd.f32 0.0, %v665
    %667 = vdwg.mxu0
    %v668 = vadd.f32 %v569, %v659
    %v669 = vadd.f32 %v570, %v661
    %v670 = vadd.f32 %v571, %v664
    %v671 = vadd.f32 %v572, %v666
    %v672 = vld [vmem:[#allocation2 + $0x100] sm:$0xf]
    %v673 = vld [vmem:[#allocation2 + $0x104] sm:$0xf]
    %v674 = vld [vmem:[#allocation2 + $0x108] sm:$0xf]
    %v675 = vld [vmem:[#allocation2 + $0x10c] sm:$0xf]
    %v676 = vld [vmem:[#allocation2 + $0x110] sm:$0xf]
    %v677 = vld [vmem:[#allocation2 + $0x114] sm:$0xf]
    %v678 = vld [vmem:[#allocation2 + $0x118] sm:$0xf]
    %v679 = vld [vmem:[#allocation2 + $0x11c] sm:$0xf]
    %v680 = vld [vmem:[#allocation2 + $0x120] sm:$0xf]
    %v681 = vld [vmem:[#allocation2 + $0x124] sm:$0xf]
    %v682 = vld [vmem:[#allocation2 + $0x128] sm:$0xf]
    %v683 = vld [vmem:[#allocation2 + $0x12c] sm:$0xf]
    %v684 = vld [vmem:[#allocation2 + $0x130] sm:$0xf]
    %v685 = vld [vmem:[#allocation2 + $0x134] sm:$0xf]
    %v686 = vld [vmem:[#allocation2 + $0x138] sm:$0xf]
    %v687 = vld [vmem:[#allocation2 + $0x13c] sm:$0xf]
    %v692 = vunpack.c.l.b16 %v280
    %v693 = vunpack.c.l.b16 %v281
    %v694 = vunpack.c.l.b16 %v282
    %v695 = vunpack.c.l.b16 %v283
    %v696 = vpack.c.b16 %v693, %v692
    %v697 = vpack.c.b16 %v695, %v694
    %v716 = vunpack.c.l.b16 %v672
    %v717 = vunpack.c.l.b16 %v673
    %v718 = vunpack.c.l.b16 %v674
    %v719 = vunpack.c.l.b16 %v675
    %v720 = vunpack.c.l.b16 %v676
    %v721 = vunpack.c.l.b16 %v677
    %v722 = vunpack.c.l.b16 %v678
    %v723 = vunpack.c.l.b16 %v679
    %v724 = vunpack.c.l.b16 %v680
    %v725 = vunpack.c.l.b16 %v681
    %v726 = vunpack.c.l.b16 %v682
    %v727 = vunpack.c.l.b16 %v683
    %v728 = vunpack.c.l.b16 %v684
    %v729 = vunpack.c.l.b16 %v685
    %v730 = vunpack.c.l.b16 %v686
    %v731 = vunpack.c.l.b16 %v687
    %v732 = vpack.c.b16 %v717, %v716
    %v733 = vpack.c.b16 %v719, %v718
    %v734 = vpack.c.b16 %v721, %v720
    %v735 = vpack.c.b16 %v723, %v722
    %v736 = vpack.c.b16 %v725, %v724
    %v737 = vpack.c.b16 %v727, %v726
    %v738 = vpack.c.b16 %v729, %v728
    %v739 = vpack.c.b16 %v731, %v730
    %748 = vmatpush.bf16.msra.mxu0 %v739
    %749 = vmatpush.bf16.msra.mxu0 %v738
    %750 = vmatpush.bf16.msra.mxu0 %v737
    %751 = vmatpush.bf16.msra.mxu0 %v736
    %752 = vmatpush.bf16.msra.mxu0 %v735
    %753 = vmatpush.bf16.msra.mxu0 %v734
    %754 = vmatpush.bf16.msra.mxu0 %v733
    %755 = vmatpush.bf16.msra.mxu0 %v732
    %756 = vmatmul.bf16.gmra.mxu0 %v696
    %v757 = vpop.f32.mrf.mxu0
    %v758 = vadd.f32 0.0, %v757
    %v759 = vpop.f32.mrf.mxu0
    %v760 = vadd.f32 0.0, %v759
    %761 = vmatmul.bf16.gmra.mxu0 %v697
    %v762 = vpop.f32.mrf.mxu0
    %v763 = vadd.f32 0.0, %v762
    %v764 = vpop.f32.mrf.mxu0
    %v765 = vadd.f32 0.0, %v764
    %766 = vdwg.mxu0
    %v767 = vadd.f32 %v668, %v758
    %v768 = vadd.f32 %v669, %v760
    %v769 = vadd.f32 %v670, %v763
    %v770 = vadd.f32 %v671, %v765
    %v771 = vperm.slane %v101, 0
    %v772 = vadd.f32 %v767, %v771
    %v773 = vadd.f32 %v768, %v771
    %v774 = vadd.f32 %v769, %v771
    %v775 = vadd.f32 %v770, %v771
    %v776 = vmax.f32 %v772, 0.0
    %v777 = vmax.f32 %v773, 0.0
    %v778 = vmax.f32 %v774, 0.0
    %v779 = vmax.f32 %v775, 0.0
    %v780 = vld [vmem:[%s8 + $0x1] sm:$0x1]
    %v781 = vpack.c.bf16 %v777, %v776
    %v782 = vpack.c.bf16 %v779, %v778
    %v783 = vld [vmem:[%s3] sm:$0xf]
    %v784 = vld [vmem:[%s3 + $0x4] sm:$0xf]
    %v785 = vld [vmem:[%s3 + $0x8] sm:$0xf]
    %v786 = vld [vmem:[%s3 + $0xc] sm:$0xf]
    %v787 = vld [vmem:[%s3 + $0x10] sm:$0xf]
    %v788 = vld [vmem:[%s3 + $0x14] sm:$0xf]
    %v789 = vld [vmem:[%s3 + $0x18] sm:$0xf]
    %v790 = vld [vmem:[%s3 + $0x1c] sm:$0xf]
    %v791 = vld [vmem:[%s3 + $0x20] sm:$0xf]
    %v792 = vld [vmem:[%s3 + $0x24] sm:$0xf]
    %v793 = vld [vmem:[%s3 + $0x28] sm:$0xf]
    %v794 = vld [vmem:[%s3 + $0x2c] sm:$0xf]
    %v795 = vld [vmem:[%s3 + $0x30] sm:$0xf]
    %v796 = vld [vmem:[%s3 + $0x34] sm:$0xf]
    %v797 = vld [vmem:[%s3 + $0x38] sm:$0xf]
    %v798 = vld [vmem:[%s3 + $0x3c] sm:$0xf]
    %v799 = vperm.slane %v780, 0
    %v816 = vunpack.c.l.b16 %v783
    %v817 = vunpack.c.l.b16 %v784
    %v818 = vunpack.c.l.b16 %v785
    %v819 = vunpack.c.l.b16 %v786
    %v820 = vunpack.c.l.b16 %v787
    %v821 = vunpack.c.l.b16 %v788
    %v822 = vunpack.c.l.b16 %v789
    %v823 = vunpack.c.l.b16 %v790
    %v824 = vunpack.c.l.b16 %v791
    %v825 = vunpack.c.l.b16 %v792
    %v826 = vunpack.c.l.b16 %v793
    %v827 = vunpack.c.l.b16 %v794
    %v828 = vunpack.c.l.b16 %v795
    %v829 = vunpack.c.l.b16 %v796
    %v830 = vunpack.c.l.b16 %v797
    %v831 = vunpack.c.l.b16 %v798
    %v832 = vpack.c.b16 %v817, %v816
    %v833 = vpack.c.b16 %v819, %v818
    %v834 = vpack.c.b16 %v821, %v820
    %v835 = vpack.c.b16 %v823, %v822
    %v836 = vpack.c.b16 %v825, %v824
    %v837 = vpack.c.b16 %v827, %v826
    %v838 = vpack.c.b16 %v829, %v828
    %v839 = vpack.c.b16 %v831, %v830
    %848 = vmatpush.bf16.msra.mxu0 %v839
    %849 = vmatpush.bf16.msra.mxu0 %v838
    %850 = vmatpush.bf16.msra.mxu0 %v837
    %851 = vmatpush.bf16.msra.mxu0 %v836
    %852 = vmatpush.bf16.msra.mxu0 %v835
    %853 = vmatpush.bf16.msra.mxu0 %v834
    %854 = vmatpush.bf16.msra.mxu0 %v833
    %855 = vmatpush.bf16.msra.mxu0 %v832
    %856 = vmatmul.bf16.gmra.mxu0 %v781
    %v857 = vpop.f32.mrf.mxu0
    %v858 = vadd.f32 %v799, %v857
    %v859 = vpop.f32.mrf.mxu0
    %v860 = vadd.f32 %v799, %v859
    %861 = vmatmul.bf16.gmra.mxu0 %v782
    %v862 = vpop.f32.mrf.mxu0
    %v863 = vadd.f32 %v799, %v862
    %v864 = vpop.f32.mrf.mxu0
    %v865 = vadd.f32 %v799, %v864
    %866 = vdwg.mxu0
    %v867 = vmax.f32 %v858, 0.0
    %v868 = vmax.f32 %v860, 0.0
    %v869 = vmax.f32 %v863, 0.0
    %v870 = vmax.f32 %v865, 0.0
    %v871 = vld [vmem:[%s8 + $0x2] sm:$0x1]
    %v872 = vpack.c.bf16 %v868, %v867
    %v873 = vpack.c.bf16 %v870, %v869
    %874 = vmatpush.bf16.msra.mxu0 0
    %875 = vmatpush.bf16.msra.mxu0 0
    %876 = vmatpush.bf16.msra.mxu0 0
    %877 = vmatpush.bf16.msra.mxu0 0
    %878 = vmatpush.bf16.msra.mxu0 0
    %879 = vmatpush.bf16.msra.mxu0 0
    %880 = vmatpush.bf16.msra.mxu0 %v873
    %881 = vmatpush.bf16.msra.mxu0 %v872
    %882 = vmatmul.bf16.gmra.mxu0 %v176
    %v883 = vpop.f32.mrf.mxu0
    %v884 = vadd.f32 0.0, %v883
    %v885 = vpop.f32.mrf.mxu0
    %v886 = vadd.f32 0.0, %v885
    %887 = vmatmul.bf16.gmra.mxu0 %v179
    %v888 = vpop.f32.mrf.mxu0
    %v889 = vadd.f32 0.0, %v888
    %v890 = vpop.f32.mrf.mxu0
    %v891 = vadd.f32 0.0, %v890
    %892 = vmatmul.bf16.gmra.mxu0 %v182
    %v893 = vpop.f32.mrf.mxu0
    %v894 = vadd.f32 0.0, %v893
    %v895 = vpop.f32.mrf.mxu0
    %v896 = vadd.f32 0.0, %v895
    %897 = vmatmul.bf16.gmra.mxu0 %v185
    %v898 = vpop.f32.mrf.mxu0
    %v899 = vadd.f32 0.0, %v898
    %v900 = vpop.f32.mrf.mxu0
    %v901 = vadd.f32 0.0, %v900
    %902 = vmatmul.bf16.gmra.mxu0 %v188
    %v903 = vpop.f32.mrf.mxu0
    %v904 = vadd.f32 0.0, %v903
    %v905 = vpop.f32.mrf.mxu0
    %v906 = vadd.f32 0.0, %v905
    %907 = vmatmul.bf16.gmra.mxu0 %v191
    %v908 = vpop.f32.mrf.mxu0
    %v909 = vadd.f32 0.0, %v908
    %v910 = vpop.f32.mrf.mxu0
    %v911 = vadd.f32 0.0, %v910
    %912 = vmatmul.bf16.gmra.mxu0 %v194
    %v913 = vpop.f32.mrf.mxu0
    %v914 = vadd.f32 0.0, %v913
    %v915 = vpop.f32.mrf.mxu0
    %v916 = vadd.f32 0.0, %v915
    %917 = vmatmul.bf16.gmra.mxu0 %v197
    %v918 = vpop.f32.mrf.mxu0
    %v919 = vadd.f32 0.0, %v918
    %v920 = vpop.f32.mrf.mxu0
    %v921 = vadd.f32 0.0, %v920
    %922 = vmatmul.bf16.gmra.mxu0 %v200
    %v923 = vpop.f32.mrf.mxu0
    %v924 = vadd.f32 0.0, %v923
    %v925 = vpop.f32.mrf.mxu0
    %v926 = vadd.f32 0.0, %v925
    %927 = vmatmul.bf16.gmra.mxu0 %v203
    %v928 = vpop.f32.mrf.mxu0
    %v929 = vadd.f32 0.0, %v928
    %v930 = vpop.f32.mrf.mxu0
    %v931 = vadd.f32 0.0, %v930
    %932 = vdwg.mxu0
    %v933 = vpack.c.bf16 %v884, %v884
    %v934 = vpack.c.bf16 %v886, %v886
    %v935 = vpack.c.bf16 %v889, %v889
    %v936 = vpack.c.bf16 %v891, %v891
    %v937 = vpack.c.bf16 %v894, %v894
    %v938 = vpack.c.bf16 %v896, %v896
    %v939 = vpack.c.bf16 %v899, %v899
    %v940 = vpack.c.bf16 %v901, %v901
    %v941 = vpack.c.bf16 %v904, %v904
    %v942 = vpack.c.bf16 %v906, %v906
    %v943 = vpack.c.bf16 %v909, %v909
    %v944 = vpack.c.bf16 %v911, %v911
    %v945 = vpack.c.bf16 %v914, %v914
    %v946 = vpack.c.bf16 %v916, %v916
    %v947 = vpack.c.bf16 %v919, %v919
    %v948 = vpack.c.bf16 %v921, %v921
    %v949 = vpack.c.bf16 %v924, %v924
    %v950 = vpack.c.bf16 %v926, %v926
    %v951 = vpack.c.bf16 %v929, %v929
    %v952 = vpack.c.bf16 %v931, %v931
    %v953 = vld [vmem:[#allocation5] sm:$0xf]
    %v954 = vld [vmem:[#allocation5 + $0x4] sm:$0xf]
    %v955 = vld [vmem:[#allocation5 + $0x8] sm:$0xf]
    %v956 = vld [vmem:[#allocation5 + $0xc] sm:$0xf]
    %v957 = vld [vmem:[#allocation5 + $0x10] sm:$0xf]
    %v958 = vld [vmem:[#allocation5 + $0x14] sm:$0xf]
    %v959 = vld [vmem:[#allocation5 + $0x18] sm:$0xf]
    %v960 = vld [vmem:[#allocation5 + $0x1c] sm:$0xf]
    %v961 = vld [vmem:[#allocation5 + $0x20] sm:$0xf]
    %v962 = vld [vmem:[#allocation5 + $0x24] sm:$0xf]
    %v963 = vld [vmem:[#allocation5 + $0x28] sm:$0xf]
    %v964 = vld [vmem:[#allocation5 + $0x2c] sm:$0xf]
    %v965 = vld [vmem:[#allocation5 + $0x30] sm:$0xf]
    %v966 = vld [vmem:[#allocation5 + $0x34] sm:$0xf]
    %v967 = vld [vmem:[#allocation5 + $0x38] sm:$0xf]
    %v968 = vld [vmem:[#allocation5 + $0x3c] sm:$0xf]
    %v969 = vld [vmem:[#allocation5 + $0x40] sm:$0xf]
    %v970 = vld [vmem:[#allocation5 + $0x44] sm:$0xf]
    %v971 = vld [vmem:[#allocation5 + $0x48] sm:$0xf]
    %v972 = vld [vmem:[#allocation5 + $0x4c] sm:$0xf]
    %v973 = vld [vmem:[#allocation5 + $0x50] sm:$0xf]
    %v974 = vld [vmem:[#allocation5 + $0x54] sm:$0xf]
    %v975 = vld [vmem:[#allocation5 + $0x58] sm:$0xf]
    %v976 = vld [vmem:[#allocation5 + $0x5c] sm:$0xf]
    %v977 = vld [vmem:[#allocation5 + $0x60] sm:$0xf]
    %v978 = vld [vmem:[#allocation5 + $0x64] sm:$0xf]
    %v979 = vld [vmem:[#allocation5 + $0x68] sm:$0xf]
    %v980 = vld [vmem:[#allocation5 + $0x6c] sm:$0xf]
    %v981 = vld [vmem:[#allocation5 + $0x70] sm:$0xf]
    %v982 = vld [vmem:[#allocation5 + $0x74] sm:$0xf]
    %v983 = vld [vmem:[#allocation5 + $0x78] sm:$0xf]
    %v984 = vld [vmem:[#allocation5 + $0x7c] sm:$0xf]
    %v989 = vunpack.c.l.b16 %v937
    %v990 = vunpack.c.l.b16 %v938
    %v991 = vunpack.c.l.b16 %v939
    %v992 = vunpack.c.l.b16 %v940
    %v993 = vpack.c.b16 %v990, %v989
    %v994 = vpack.c.b16 %v992, %v991
    %v1013 = vunpack.c.l.b16 %v969
    %v1014 = vunpack.c.l.b16 %v970
    %v1015 = vunpack.c.l.b16 %v971
    %v1016 = vunpack.c.l.b16 %v972
    %v1017 = vunpack.c.l.b16 %v973
    %v1018 = vunpack.c.l.b16 %v974
    %v1019 = vunpack.c.l.b16 %v975
    %v1020 = vunpack.c.l.b16 %v976
    %v1021 = vunpack.c.l.b16 %v977
    %v1022 = vunpack.c.l.b16 %v978
    %v1023 = vunpack.c.l.b16 %v979
    %v1024 = vunpack.c.l.b16 %v980
    %v1025 = vunpack.c.l.b16 %v981
    %v1026 = vunpack.c.l.b16 %v982
    %v1027 = vunpack.c.l.b16 %v983
    %v1028 = vunpack.c.l.b16 %v984
    %v1029 = vpack.c.b16 %v1014, %v1013
    %v1030 = vpack.c.b16 %v1016, %v1015
    %v1031 = vpack.c.b16 %v1018, %v1017
    %v1032 = vpack.c.b16 %v1020, %v1019
    %v1033 = vpack.c.b16 %v1022, %v1021
    %v1034 = vpack.c.b16 %v1024, %v1023
    %v1035 = vpack.c.b16 %v1026, %v1025
    %v1036 = vpack.c.b16 %v1028, %v1027
    %1045 = vmatpush.bf16.msra.mxu0 %v1036
    %1046 = vmatpush.bf16.msra.mxu0 %v1035
    %1047 = vmatpush.bf16.msra.mxu0 %v1034
    %1048 = vmatpush.bf16.msra.mxu0 %v1033
    %1049 = vmatpush.bf16.msra.mxu0 %v1032
    %1050 = vmatpush.bf16.msra.mxu0 %v1031
    %1051 = vmatpush.bf16.msra.mxu0 %v1030
    %1052 = vmatpush.bf16.msra.mxu0 %v1029
    %1053 = vmatmul.bf16.gmra.mxu0 %v993
    %v1054 = vpop.f32.mrf.mxu0
    %v1055 = vadd.f32 0.0, %v1054
    %v1056 = vpop.f32.mrf.mxu0
    %v1057 = vadd.f32 0.0, %v1056
    %1058 = vmatmul.bf16.gmra.mxu0 %v994
    %v1059 = vpop.f32.mrf.mxu0
    %v1060 = vadd.f32 0.0, %v1059
    %v1061 = vpop.f32.mrf.mxu0
    %v1062 = vadd.f32 0.0, %v1061
    %1063 = vdwg.mxu0
    %v1068 = vunpack.c.l.b16 %v933
    %v1069 = vunpack.c.l.b16 %v934
    %v1070 = vunpack.c.l.b16 %v935
    %v1071 = vunpack.c.l.b16 %v936
    %v1072 = vpack.c.b16 %v1069, %v1068
    %v1073 = vpack.c.b16 %v1071, %v1070
    %v1092 = vunpack.c.l.b16 %v953
    %v1093 = vunpack.c.l.b16 %v954
    %v1094 = vunpack.c.l.b16 %v955
    %v1095 = vunpack.c.l.b16 %v956
    %v1096 = vunpack.c.l.b16 %v957
    %v1097 = vunpack.c.l.b16 %v958
    %v1098 = vunpack.c.l.b16 %v959
    %v1099 = vunpack.c.l.b16 %v960
    %v1100 = vunpack.c.l.b16 %v961
    %v1101 = vunpack.c.l.b16 %v962
    %v1102 = vunpack.c.l.b16 %v963
    %v1103 = vunpack.c.l.b16 %v964
    %v1104 = vunpack.c.l.b16 %v965
    %v1105 = vunpack.c.l.b16 %v966
    %v1106 = vunpack.c.l.b16 %v967
    %v1107 = vunpack.c.l.b16 %v968
    %v1108 = vpack.c.b16 %v1093, %v1092
    %v1109 = vpack.c.b16 %v1095, %v1094
    %v1110 = vpack.c.b16 %v1097, %v1096
    %v1111 = vpack.c.b16 %v1099, %v1098
    %v1112 = vpack.c.b16 %v1101, %v1100
    %v1113 = vpack.c.b16 %v1103, %v1102
    %v1114 = vpack.c.b16 %v1105, %v1104
    %v1115 = vpack.c.b16 %v1107, %v1106
    %1124 = vmatpush.bf16.msra.mxu0 %v1115
    %1125 = vmatpush.bf16.msra.mxu0 %v1114
    %1126 = vmatpush.bf16.msra.mxu0 %v1113
    %1127 = vmatpush.bf16.msra.mxu0 %v1112
    %1128 = vmatpush.bf16.msra.mxu0 %v1111
    %1129 = vmatpush.bf16.msra.mxu0 %v1110
    %1130 = vmatpush.bf16.msra.mxu0 %v1109
    %1131 = vmatpush.bf16.msra.mxu0 %v1108
    %1132 = vmatmul.bf16.gmra.mxu0 %v1072
    %v1133 = vpop.f32.mrf.mxu0
    %v1134 = vadd.f32 %v1055, %v1133
    %v1135 = vpop.f32.mrf.mxu0
    %v1136 = vadd.f32 %v1057, %v1135
    %1137 = vmatmul.bf16.gmra.mxu0 %v1073
    %v1138 = vpop.f32.mrf.mxu0
    %v1139 = vadd.f32 %v1060, %v1138
    %v1140 = vpop.f32.mrf.mxu0
    %v1141 = vadd.f32 %v1062, %v1140
    %1142 = vdwg.mxu0
    %v1143 = vld [vmem:[#allocation5 + $0x80] sm:$0xf]
    %v1144 = vld [vmem:[#allocation5 + $0x84] sm:$0xf]
    %v1145 = vld [vmem:[#allocation5 + $0x88] sm:$0xf]
    %v1146 = vld [vmem:[#allocation5 + $0x8c] sm:$0xf]
    %v1147 = vld [vmem:[#allocation5 + $0x90] sm:$0xf]
    %v1148 = vld [vmem:[#allocation5 + $0x94] sm:$0xf]
    %v1149 = vld [vmem:[#allocation5 + $0x98] sm:$0xf]
    %v1150 = vld [vmem:[#allocation5 + $0x9c] sm:$0xf]
    %v1151 = vld [vmem:[#allocation5 + $0xa0] sm:$0xf]
    %v1152 = vld [vmem:[#allocation5 + $0xa4] sm:$0xf]
    %v1153 = vld [vmem:[#allocation5 + $0xa8] sm:$0xf]
    %v1154 = vld [vmem:[#allocation5 + $0xac] sm:$0xf]
    %v1155 = vld [vmem:[#allocation5 + $0xb0] sm:$0xf]
    %v1156 = vld [vmem:[#allocation5 + $0xb4] sm:$0xf]
    %v1157 = vld [vmem:[#allocation5 + $0xb8] sm:$0xf]
    %v1158 = vld [vmem:[#allocation5 + $0xbc] sm:$0xf]
    %v1163 = vunpack.c.l.b16 %v941
    %v1164 = vunpack.c.l.b16 %v942
    %v1165 = vunpack.c.l.b16 %v943
    %v1166 = vunpack.c.l.b16 %v944
    %v1167 = vpack.c.b16 %v1164, %v1163
    %v1168 = vpack.c.b16 %v1166, %v1165
    %v1187 = vunpack.c.l.b16 %v1143
    %v1188 = vunpack.c.l.b16 %v1144
    %v1189 = vunpack.c.l.b16 %v1145
    %v1190 = vunpack.c.l.b16 %v1146
    %v1191 = vunpack.c.l.b16 %v1147
    %v1192 = vunpack.c.l.b16 %v1148
    %v1193 = vunpack.c.l.b16 %v1149
    %v1194 = vunpack.c.l.b16 %v1150
    %v1195 = vunpack.c.l.b16 %v1151
    %v1196 = vunpack.c.l.b16 %v1152
    %v1197 = vunpack.c.l.b16 %v1153
    %v1198 = vunpack.c.l.b16 %v1154
    %v1199 = vunpack.c.l.b16 %v1155
    %v1200 = vunpack.c.l.b16 %v1156
    %v1201 = vunpack.c.l.b16 %v1157
    %v1202 = vunpack.c.l.b16 %v1158
    %v1203 = vpack.c.b16 %v1188, %v1187
    %v1204 = vpack.c.b16 %v1190, %v1189
    %v1205 = vpack.c.b16 %v1192, %v1191
    %v1206 = vpack.c.b16 %v1194, %v1193
    %v1207 = vpack.c.b16 %v1196, %v1195
    %v1208 = vpack.c.b16 %v1198, %v1197
    %v1209 = vpack.c.b16 %v1200, %v1199
    %v1210 = vpack.c.b16 %v1202, %v1201
    %1219 = vmatpush.bf16.msra.mxu0 %v1210
    %1220 = vmatpush.bf16.msra.mxu0 %v1209
    %1221 = vmatpush.bf16.msra.mxu0 %v1208
    %1222 = vmatpush.bf16.msra.mxu0 %v1207
    %1223 = vmatpush.bf16.msra.mxu0 %v1206
    %1224 = vmatpush.bf16.msra.mxu0 %v1205
    %1225 = vmatpush.bf16.msra.mxu0 %v1204
    %1226 = vmatpush.bf16.msra.mxu0 %v1203
    %1227 = vmatmul.bf16.gmra.mxu0 %v1167
    %v1228 = vpop.f32.mrf.mxu0
    %v1229 = vadd.f32 0.0, %v1228
    %v1230 = vpop.f32.mrf.mxu0
    %v1231 = vadd.f32 0.0, %v1230
    %1232 = vmatmul.bf16.gmra.mxu0 %v1168
    %v1233 = vpop.f32.mrf.mxu0
    %v1234 = vadd.f32 0.0, %v1233
    %v1235 = vpop.f32.mrf.mxu0
    %v1236 = vadd.f32 0.0, %v1235
    %1237 = vdwg.mxu0
    %v1238 = vadd.f32 %v1134, %v1229
    %v1239 = vadd.f32 %v1136, %v1231
    %v1240 = vadd.f32 %v1139, %v1234
    %v1241 = vadd.f32 %v1141, %v1236
    %v1242 = vld [vmem:[#allocation5 + $0xc0] sm:$0xf]
    %v1243 = vld [vmem:[#allocation5 + $0xc4] sm:$0xf]
    %v1244 = vld [vmem:[#allocation5 + $0xc8] sm:$0xf]
    %v1245 = vld [vmem:[#allocation5 + $0xcc] sm:$0xf]
    %v1246 = vld [vmem:[#allocation5 + $0xd0] sm:$0xf]
    %v1247 = vld [vmem:[#allocation5 + $0xd4] sm:$0xf]
    %v1248 = vld [vmem:[#allocation5 + $0xd8] sm:$0xf]
    %v1249 = vld [vmem:[#allocation5 + $0xdc] sm:$0xf]
    %v1250 = vld [vmem:[#allocation5 + $0xe0] sm:$0xf]
    %v1251 = vld [vmem:[#allocation5 + $0xe4] sm:$0xf]
    %v1252 = vld [vmem:[#allocation5 + $0xe8] sm:$0xf]
    %v1253 = vld [vmem:[#allocation5 + $0xec] sm:$0xf]
    %v1254 = vld [vmem:[#allocation5 + $0xf0] sm:$0xf]
    %v1255 = vld [vmem:[#allocation5 + $0xf4] sm:$0xf]
    %v1256 = vld [vmem:[#allocation5 + $0xf8] sm:$0xf]
    %v1257 = vld [vmem:[#allocation5 + $0xfc] sm:$0xf]
    %v1262 = vunpack.c.l.b16 %v945
    %v1263 = vunpack.c.l.b16 %v946
    %v1264 = vunpack.c.l.b16 %v947
    %v1265 = vunpack.c.l.b16 %v948
    %v1266 = vpack.c.b16 %v1263, %v1262
    %v1267 = vpack.c.b16 %v1265, %v1264
    %v1286 = vunpack.c.l.b16 %v1242
    %v1287 = vunpack.c.l.b16 %v1243
    %v1288 = vunpack.c.l.b16 %v1244
    %v1289 = vunpack.c.l.b16 %v1245
    %v1290 = vunpack.c.l.b16 %v1246
    %v1291 = vunpack.c.l.b16 %v1247
    %v1292 = vunpack.c.l.b16 %v1248
    %v1293 = vunpack.c.l.b16 %v1249
    %v1294 = vunpack.c.l.b16 %v1250
    %v1295 = vunpack.c.l.b16 %v1251
    %v1296 = vunpack.c.l.b16 %v1252
    %v1297 = vunpack.c.l.b16 %v1253
    %v1298 = vunpack.c.l.b16 %v1254
    %v1299 = vunpack.c.l.b16 %v1255
    %v1300 = vunpack.c.l.b16 %v1256
    %v1301 = vunpack.c.l.b16 %v1257
    %v1302 = vpack.c.b16 %v1287, %v1286
    %v1303 = vpack.c.b16 %v1289, %v1288
    %v1304 = vpack.c.b16 %v1291, %v1290
    %v1305 = vpack.c.b16 %v1293, %v1292
    %v1306 = vpack.c.b16 %v1295, %v1294
    %v1307 = vpack.c.b16 %v1297, %v1296
    %v1308 = vpack.c.b16 %v1299, %v1298
    %v1309 = vpack.c.b16 %v1301, %v1300
    %1318 = vmatpush.bf16.msra.mxu0 %v1309
    %1319 = vmatpush.bf16.msra.mxu0 %v1308
    %1320 = vmatpush.bf16.msra.mxu0 %v1307
    %1321 = vmatpush.bf16.msra.mxu0 %v1306
    %1322 = vmatpush.bf16.msra.mxu0 %v1305
    %1323 = vmatpush.bf16.msra.mxu0 %v1304
    %1324 = vmatpush.bf16.msra.mxu0 %v1303
    %1325 = vmatpush.bf16.msra.mxu0 %v1302
    %1326 = vmatmul.bf16.gmra.mxu0 %v1266
    %v1327 = vpop.f32.mrf.mxu0
    %v1328 = vadd.f32 0.0, %v1327
    %v1329 = vpop.f32.mrf.mxu0
    %v1330 = vadd.f32 0.0, %v1329
    %1331 = vmatmul.bf16.gmra.mxu0 %v1267
    %v1332 = vpop.f32.mrf.mxu0
    %v1333 = vadd.f32 0.0, %v1332
    %v1334 = vpop.f32.mrf.mxu0
    %v1335 = vadd.f32 0.0, %v1334
    %1336 = vdwg.mxu0
    %v1337 = vadd.f32 %v1238, %v1328
    %v1338 = vadd.f32 %v1239, %v1330
    %v1339 = vadd.f32 %v1240, %v1333
    %v1340 = vadd.f32 %v1241, %v1335
    %v1341 = vld [vmem:[#allocation5 + $0x100] sm:$0xf]
    %v1342 = vld [vmem:[#allocation5 + $0x104] sm:$0xf]
    %v1343 = vld [vmem:[#allocation5 + $0x108] sm:$0xf]
    %v1344 = vld [vmem:[#allocation5 + $0x10c] sm:$0xf]
    %v1345 = vld [vmem:[#allocation5 + $0x110] sm:$0xf]
    %v1346 = vld [vmem:[#allocation5 + $0x114] sm:$0xf]
    %v1347 = vld [vmem:[#allocation5 + $0x118] sm:$0xf]
    %v1348 = vld [vmem:[#allocation5 + $0x11c] sm:$0xf]
    %v1349 = vld [vmem:[#allocation5 + $0x120] sm:$0xf]
    %v1350 = vld [vmem:[#allocation5 + $0x124] sm:$0xf]
    %v1351 = vld [vmem:[#allocation5 + $0x128] sm:$0xf]
    %v1352 = vld [vmem:[#allocation5 + $0x12c] sm:$0xf]
    %v1353 = vld [vmem:[#allocation5 + $0x130] sm:$0xf]
    %v1354 = vld [vmem:[#allocation5 + $0x134] sm:$0xf]
    %v1355 = vld [vmem:[#allocation5 + $0x138] sm:$0xf]
    %v1356 = vld [vmem:[#allocation5 + $0x13c] sm:$0xf]
    %v1361 = vunpack.c.l.b16 %v949
    %v1362 = vunpack.c.l.b16 %v950
    %v1363 = vunpack.c.l.b16 %v951
    %v1364 = vunpack.c.l.b16 %v952
    %v1365 = vpack.c.b16 %v1362, %v1361
    %v1366 = vpack.c.b16 %v1364, %v1363
    %v1385 = vunpack.c.l.b16 %v1341
    %v1386 = vunpack.c.l.b16 %v1342
    %v1387 = vunpack.c.l.b16 %v1343
    %v1388 = vunpack.c.l.b16 %v1344
    %v1389 = vunpack.c.l.b16 %v1345
    %v1390 = vunpack.c.l.b16 %v1346
    %v1391 = vunpack.c.l.b16 %v1347
    %v1392 = vunpack.c.l.b16 %v1348
    %v1393 = vunpack.c.l.b16 %v1349
    %v1394 = vunpack.c.l.b16 %v1350
    %v1395 = vunpack.c.l.b16 %v1351
    %v1396 = vunpack.c.l.b16 %v1352
    %v1397 = vunpack.c.l.b16 %v1353
    %v1398 = vunpack.c.l.b16 %v1354
    %v1399 = vunpack.c.l.b16 %v1355
    %v1400 = vunpack.c.l.b16 %v1356
    %v1401 = vpack.c.b16 %v1386, %v1385
    %v1402 = vpack.c.b16 %v1388, %v1387
    %v1403 = vpack.c.b16 %v1390, %v1389
    %v1404 = vpack.c.b16 %v1392, %v1391
    %v1405 = vpack.c.b16 %v1394, %v1393
    %v1406 = vpack.c.b16 %v1396, %v1395
    %v1407 = vpack.c.b16 %v1398, %v1397
    %v1408 = vpack.c.b16 %v1400, %v1399
    %1417 = vmatpush.bf16.msra.mxu0 %v1408
    %1418 = vmatpush.bf16.msra.mxu0 %v1407
    %1419 = vmatpush.bf16.msra.mxu0 %v1406
    %1420 = vmatpush.bf16.msra.mxu0 %v1405
    %1421 = vmatpush.bf16.msra.mxu0 %v1404
    %1422 = vmatpush.bf16.msra.mxu0 %v1403
    %1423 = vmatpush.bf16.msra.mxu0 %v1402
    %1424 = vmatpush.bf16.msra.mxu0 %v1401
    %1425 = vmatmul.bf16.gmra.mxu0 %v1365
    %v1426 = vpop.f32.mrf.mxu0
    %v1427 = vadd.f32 0.0, %v1426
    %v1428 = vpop.f32.mrf.mxu0
    %v1429 = vadd.f32 0.0, %v1428
    %1430 = vmatmul.bf16.gmra.mxu0 %v1366
    %v1431 = vpop.f32.mrf.mxu0
    %v1432 = vadd.f32 0.0, %v1431
    %v1433 = vpop.f32.mrf.mxu0
    %v1434 = vadd.f32 0.0, %v1433
    %1435 = vdwg.mxu0
    %v1436 = vadd.f32 %v1337, %v1427
    %v1437 = vadd.f32 %v1338, %v1429
    %v1438 = vadd.f32 %v1339, %v1432
    %v1439 = vadd.f32 %v1340, %v1434
    %v1440 = vperm.slane %v871, 0
    %v1441 = vadd.f32 %v1436, %v1440
    %v1442 = vadd.f32 %v1437, %v1440
    %v1443 = vadd.f32 %v1438, %v1440
    %v1444 = vadd.f32 %v1439, %v1440
    %v1445 = vmax.f32 %v1441, 0.0
    %v1446 = vmax.f32 %v1442, 0.0
    %v1447 = vmax.f32 %v1443, 0.0
    %v1448 = vmax.f32 %v1444, 0.0
    %v1449 = vpack.c.bf16 %v1446, %v1445
    %v1450 = vpack.c.bf16 %v1448, %v1447
    %v1451 = vld [vmem:[%s5] sm:$0xf]
    %v1452 = vld [vmem:[%s5 + $0x4] sm:$0xf]
    %v1453 = vld [vmem:[%s5 + $0x8] sm:$0xf]
    %v1454 = vld [vmem:[%s5 + $0xc] sm:$0xf]
    %v1459 = vunpack.c.l.b16 %v1451
    %v1460 = vunpack.c.l.b16 %v1452
    %v1461 = vunpack.c.l.b16 %v1453
    %v1462 = vunpack.c.l.b16 %v1454
    %v1463 = vpack.c.b16 %v1460, %v1459
    %v1464 = vpack.c.b16 %v1462, %v1461
    %v1466 = vsel %vm174, %v1463, 0
    %v1469 = vsel %vm174, %v1464, 0
    %1471 = vmatpush.bf16.msra.mxu0 0
    %1472 = vmatpush.bf16.msra.mxu0 0
    %1473 = vmatpush.bf16.msra.mxu0 0
    %1474 = vmatpush.bf16.msra.mxu0 0
    %1475 = vmatpush.bf16.msra.mxu0 0
    %1476 = vmatpush.bf16.msra.mxu0 0
    %1477 = vmatpush.bf16.msra.mxu0 %v1450
    %1478 = vmatpush.bf16.msra.mxu0 %v1449
    %1479 = vmatmul.bf16.gmra.mxu0 %v1466
    %v1480 = vpop.f32.mrf.mxu0
    %v1481 = vadd.f32 0.0, %v1480
    %v1482 = vpop.f32.mrf.mxu0
    %v1483 = vadd.f32 0.0, %v1482
    %1484 = vmatmul.bf16.gmra.mxu0 %v1469
    %v1485 = vpop.f32.mrf.mxu0
    %v1486 = vadd.f32 0.0, %v1485
    %v1487 = vpop.f32.mrf.mxu0
    %v1488 = vadd.f32 0.0, %v1487
    %1489 = vdwg.mxu0
    %v1490 = vpack.c.bf16 %v1483, %v1481
    %v1491 = vpack.c.bf16 %v1488, %v1486
    %v1492 = vld [vmem:[#allocation7] sm:$0xf]
    %v1493 = vld [vmem:[#allocation7 + $0x4] sm:$0xf]
    %v1494 = vld [vmem:[#allocation7 + $0x8] sm:$0xf]
    %v1495 = vld [vmem:[#allocation7 + $0xc] sm:$0xf]
    %v1496 = vld [vmem:[#allocation7 + $0x10] sm:$0xf]
    %v1497 = vld [vmem:[#allocation7 + $0x14] sm:$0xf]
    %v1498 = vld [vmem:[#allocation7 + $0x18] sm:$0xf]
    %v1499 = vld [vmem:[#allocation7 + $0x1c] sm:$0xf]
    %v1500 = vld [vmem:[#allocation7 + $0x20] sm:$0xf]
    %v1501 = vld [vmem:[#allocation7 + $0x24] sm:$0xf]
    %v1502 = vld [vmem:[#allocation7 + $0x28] sm:$0xf]
    %v1503 = vld [vmem:[#allocation7 + $0x2c] sm:$0xf]
    %v1504 = vld [vmem:[#allocation7 + $0x30] sm:$0xf]
    %v1505 = vld [vmem:[#allocation7 + $0x34] sm:$0xf]
    %v1506 = vld [vmem:[#allocation7 + $0x38] sm:$0xf]
    %v1507 = vld [vmem:[#allocation7 + $0x3c] sm:$0xf]
    %v1508 = vld [vmem:[#allocation8] sm:$0xf]
    %v1509 = vld [vmem:[#allocation8 + $0x4] sm:$0xf]
    %v1510 = vld [vmem:[#allocation8 + $0x8] sm:$0xf]
    %v1511 = vld [vmem:[#allocation8 + $0xc] sm:$0xf]
    %v1512 = vld [vmem:[#allocation8 + $0x10] sm:$0xf]
    %v1513 = vld [vmem:[#allocation8 + $0x14] sm:$0xf]
    %v1514 = vld [vmem:[#allocation8 + $0x18] sm:$0xf]
    %v1515 = vld [vmem:[#allocation8 + $0x1c] sm:$0xf]
    %v1516 = vld [vmem:[#allocation8 + $0x20] sm:$0xf]
    %v1517 = vld [vmem:[#allocation8 + $0x24] sm:$0xf]
    %v1518 = vld [vmem:[#allocation8 + $0x28] sm:$0xf]
    %v1519 = vld [vmem:[#allocation8 + $0x2c] sm:$0xf]
    %v1520 = vld [vmem:[#allocation8 + $0x30] sm:$0xf]
    %v1521 = vld [vmem:[#allocation8 + $0x34] sm:$0xf]
    %v1522 = vld [vmem:[#allocation8 + $0x38] sm:$0xf]
    %v1523 = vld [vmem:[#allocation8 + $0x3c] sm:$0xf]
    %v1540 = vunpack.c.l.b16 %v1508
    %v1541 = vunpack.c.l.b16 %v1509
    %v1542 = vunpack.c.l.b16 %v1510
    %v1543 = vunpack.c.l.b16 %v1511
    %v1544 = vunpack.c.l.b16 %v1512
    %v1545 = vunpack.c.l.b16 %v1513
    %v1546 = vunpack.c.l.b16 %v1514
    %v1547 = vunpack.c.l.b16 %v1515
    %v1548 = vunpack.c.l.b16 %v1516
    %v1549 = vunpack.c.l.b16 %v1517
    %v1550 = vunpack.c.l.b16 %v1518
    %v1551 = vunpack.c.l.b16 %v1519
    %v1552 = vunpack.c.l.b16 %v1520
    %v1553 = vunpack.c.l.b16 %v1521
    %v1554 = vunpack.c.l.b16 %v1522
    %v1555 = vunpack.c.l.b16 %v1523
    %v1556 = vpack.c.b16 %v1541, %v1540
    %v1557 = vpack.c.b16 %v1543, %v1542
    %v1558 = vpack.c.b16 %v1545, %v1544
    %v1559 = vpack.c.b16 %v1547, %v1546
    %v1560 = vpack.c.b16 %v1549, %v1548
    %v1561 = vpack.c.b16 %v1551, %v1550
    %v1562 = vpack.c.b16 %v1553, %v1552
    %v1563 = vpack.c.b16 %v1555, %v1554
    %1572 = vmatpush.bf16.msra.mxu0 %v1563
    %1573 = vmatpush.bf16.msra.mxu0 %v1562
    %1574 = vmatpush.bf16.msra.mxu0 %v1561
    %1575 = vmatpush.bf16.msra.mxu0 %v1560
    %1576 = vmatpush.bf16.msra.mxu0 %v1559
    %1577 = vmatpush.bf16.msra.mxu0 %v1558
    %1578 = vmatpush.bf16.msra.mxu0 %v1557
    %1579 = vmatpush.bf16.msra.mxu0 %v1556
    %1580 = vmatmul.bf16.gmra.mxu0 %v1449
    %v1581 = vpop.f32.mrf.mxu0
    %v1582 = vadd.f32 0.0, %v1581
    %v1583 = vpop.f32.mrf.mxu0
    %v1584 = vadd.f32 0.0, %v1583
    %1585 = vmatmul.bf16.gmra.mxu0 %v1450
    %v1586 = vpop.f32.mrf.mxu0
    %v1587 = vadd.f32 0.0, %v1586
    %v1588 = vpop.f32.mrf.mxu0
    %v1589 = vadd.f32 0.0, %v1588
    %1590 = vdwg.mxu0
    %v1607 = vunpack.c.l.b16 %v1492
    %v1608 = vunpack.c.l.b16 %v1493
    %v1609 = vunpack.c.l.b16 %v1494
    %v1610 = vunpack.c.l.b16 %v1495
    %v1611 = vunpack.c.l.b16 %v1496
    %v1612 = vunpack.c.l.b16 %v1497
    %v1613 = vunpack.c.l.b16 %v1498
    %v1614 = vunpack.c.l.b16 %v1499
    %v1615 = vunpack.c.l.b16 %v1500
    %v1616 = vunpack.c.l.b16 %v1501
    %v1617 = vunpack.c.l.b16 %v1502
    %v1618 = vunpack.c.l.b16 %v1503
    %v1619 = vunpack.c.l.b16 %v1504
    %v1620 = vunpack.c.l.b16 %v1505
    %v1621 = vunpack.c.l.b16 %v1506
    %v1622 = vunpack.c.l.b16 %v1507
    %v1623 = vpack.c.b16 %v1608, %v1607
    %v1624 = vpack.c.b16 %v1610, %v1609
    %v1625 = vpack.c.b16 %v1612, %v1611
    %v1626 = vpack.c.b16 %v1614, %v1613
    %v1627 = vpack.c.b16 %v1616, %v1615
    %v1628 = vpack.c.b16 %v1618, %v1617
    %v1629 = vpack.c.b16 %v1620, %v1619
    %v1630 = vpack.c.b16 %v1622, %v1621
    %1639 = vmatpush.bf16.msra.mxu0 %v1630
    %1640 = vmatpush.bf16.msra.mxu0 %v1629
    %1641 = vmatpush.bf16.msra.mxu0 %v1628
    %1642 = vmatpush.bf16.msra.mxu0 %v1627
    %1643 = vmatpush.bf16.msra.mxu0 %v1626
    %1644 = vmatpush.bf16.msra.mxu0 %v1625
    %1645 = vmatpush.bf16.msra.mxu0 %v1624
    %1646 = vmatpush.bf16.msra.mxu0 %v1623
    %1647 = vmatmul.bf16.gmra.mxu0 %v1490
    %v1648 = vpop.f32.mrf.mxu0
    %v1649 = vadd.f32 %v1582, %v1648
    %v1650 = vpop.f32.mrf.mxu0
    %v1651 = vadd.f32 %v1584, %v1650
    %1652 = vmatmul.bf16.gmra.mxu0 %v1491
    %v1653 = vpop.f32.mrf.mxu0
    %v1654 = vadd.f32 %v1587, %v1653
    %v1655 = vpop.f32.mrf.mxu0
    %v1656 = vadd.f32 %v1589, %v1655
    %1657 = vdwg.mxu0
    %v1658 = vld [vmem:[%s8 + $0x3] sm:$0x1]
    %v1659 = vperm.slane %v1658, 0
    %v1660 = vadd.f32 %v1649, %v1659
    %v1661 = vadd.f32 %v1651, %v1659
    %v1662 = vadd.f32 %v1654, %v1659
    %v1663 = vadd.f32 %v1656, %v1659
    %v1664 = vmax.f32 %v1660, 0.0
    %v1665 = vmax.f32 %v1661, 0.0
    %v1666 = vmax.f32 %v1662, 0.0
    %v1667 = vmax.f32 %v1663, 0.0
    %1668 = vst [vmem:[#allocation10] sm:$0xff] %v1664
    %1669 = vst [vmem:[#allocation10 + $0x8] sm:$0xff] %v1665
    %1670 = vst [vmem:[#allocation10 + $0x10] sm:$0xff] %v1666
    %1671 = vst [vmem:[#allocation10 + $0x18] sm:$0xff] %v1667
    // Predicated region
    $region54: #{tsb_forward.1} parent=1 // pred_check
      _
    $region55: #{tsb_forward.1} parent=1 // pred_check_branch
      %1673 = sbr.rel (0) target = $region57
    $region56: #{tsb_forward.1} parent=1 // pred_region
      %1675 = vsyncadd [#allocation4], 0
      %s1676 = sshll.u32 [#allocation10], 4
      %s1677 = int_to_ptr.vmem [resolvable:$true] %s1676
      %s1678 = sshll.u32 %s9, 4
      %s1679 = int_to_ptr.hbm [resolvable:$true] %s1678
      %1684 = dma.vmem_to_hbm [thread:$0]  %s1677, 512, %s1679, [#allocation4], 128, 128, 8
    $region57: #{tsb_forward.1} parent=1 // pred_fallthru
      _
    // Predicated region
    $region58: #{tsb_forward.1} parent=1 // pred_check
      _
    $region59: #{tsb_forward.1} parent=1 // pred_check_branch
      %1686 = sbr.rel (0) target = $region61
    $region60: #{tsb_forward.1} parent=1 // pred_region
      %1688 = dma.done [#allocation4], 512
    $region61: #{tsb_forward.1} parent=1 // pred_fallthru
      _
    %1689 = vsyncpa [#allocation3], 1
    %1690 = vsyncpa [#allocation6], 1
    %1691 = vsyncpa [#allocation9], 1
    %1692 = vsyncpa [#allocation4], 1

</llo_original>
